<compile_context>
chip_gen: v7x
topology: tpu7x:2x2x1
jax: 0.10.0
libtpu: 0.0.40
codegen_flags: <defaults>
</compile_context>

<pallas_src>
import functools

import jax
import jax.numpy as jnp
import numpy as np
from jax.experimental import pallas as pl
from jax.experimental.pallas import tpu as pltpu

INPUT_SIZE = 128     # module default input_size
HIDDEN = 32          # module hidden_size
OUTPUT_SIZE = 8      # module default output_size
DILATIONS = (1, 2, 4)    # 2**i for the 3 TCN levels, kernel_size = 2


def _tcn_kernel(x_ref, w0_ref, w20_ref, w11_ref, w21_ref, w12_ref, w22_ref,
                fcw_ref, bias_ref, o_ref, *, L):
    h0 = x_ref[...]                                   # (C_in, TN) f32, batches on lanes
    TN = h0.shape[-1]

    biases = bias_ref[...]                            # (232, 1) f32, all biases packed
    b0 = biases[0:2 * HIDDEN]                         # [b10 ; db0]  -> matches w0 rows
    b20 = biases[64:96]
    b11 = biases[96:128]
    b21 = biases[128:160]
    b12 = biases[160:192]
    b22 = biases[192:224]
    fcb = biases[224:224 + OUTPUT_SIZE]

    # Per-lane time index inside each length-L batch segment (built once, reused).
    t = jax.lax.broadcasted_iota(jnp.int32, (1, TN), 1) % L
    masks = {d: (t >= d) for d in DILATIONS}

    def shifted(h, d):
        # Causal shift by d along time: XLU roll + VPU mask.  The mask zeroes
        # t < d, which both implements the left zero-padding and kills any
        # cross-batch wrap-around introduced by the cyclic roll.
        return jnp.where(masks[d], pltpu.roll(h, shift=d, axis=1), 0.0)

    def conv_pair(h, w_ref, d):
        # Both conv taps fused into a single MXU matmul with K = 2*C_prev.
        # bf16 operands, f32 accumulate; elementwise stays f32.
        hs = jnp.concatenate([shifted(h, d), h], axis=0).astype(jnp.bfloat16)
        return jnp.dot(w_ref[...], hs, preferred_element_type=jnp.float32)

    # ---- level 0 (dilation 1): conv1 and the 1x1 downsample share one matmul ----
    y0 = conv_pair(h0, w0_ref, DILATIONS[0]) + b0     # (2*HIDDEN, TN)
    out = jnp.maximum(y0[:HIDDEN], 0.0)               # conv1 -> ReLU
    res = y0[HIDDEN:]                                 # downsample residual
    out = jnp.maximum(conv_pair(out, w20_ref, DILATIONS[0]) + b20, 0.0)
    h = jnp.maximum(out + res, 0.0)

    # ---- level 1 (dilation 2), identity residual ----
    out = jnp.maximum(conv_pair(h, w11_ref, DILATIONS[1]) + b11, 0.0)
    out = jnp.maximum(conv_pair(out, w21_ref, DILATIONS[1]) + b21, 0.0)
    h = jnp.maximum(out + h, 0.0)

    # ---- level 2 (dilation 4), identity residual ----
    out = jnp.maximum(conv_pair(h, w12_ref, DILATIONS[2]) + b12, 0.0)
    out = jnp.maximum(conv_pair(out, w22_ref, DILATIONS[2]) + b22, 0.0)
    h = jnp.maximum(out + h, 0.0)

    # ---- fc on every column (per-column op, lane-dense output) ----
    o = jnp.dot(fcw_ref[...], h.astype(jnp.bfloat16),
                preferred_element_type=jnp.float32) + fcb
    o_ref[...] = o                                    # (OUTPUT_SIZE, TN)


def _prepare_weights(params):
    """Fold the per-tap conv weights into fused (C_out, 2*C_prev) bf16 matrices
    and pack every bias vector into one f32 array."""
    def cat_taps(w):  # (2, C_out, C_prev) -> (C_out, 2*C_prev); cols [0:C] hit x[t-d]
        return jnp.concatenate([w[0], w[1]], axis=-1)

    # level 0: stack the 1x1 downsample under conv1 (it only sees the unshifted input)
    w0 = jnp.concatenate(
        [cat_taps(params['w10']),
         jnp.concatenate([jnp.zeros_like(params['dw0'][0]), params['dw0'][0]], axis=-1)],
        axis=0).astype(jnp.bfloat16)                                  # (64, 256)

    w20 = cat_taps(params['w20']).astype(jnp.bfloat16)                # (32, 64)
    w11 = cat_taps(params['w11']).astype(jnp.bfloat16)
    w21 = cat_taps(params['w21']).astype(jnp.bfloat16)
    w12 = cat_taps(params['w12']).astype(jnp.bfloat16)
    w22 = cat_taps(params['w22']).astype(jnp.bfloat16)
    fcw = params['fcw'].astype(jnp.bfloat16)                          # (8, 32)

    biases = jnp.concatenate(
        [params['b10'], params['db0'], params['b20'], params['b11'],
         params['b21'], params['b12'], params['b22'], params['fcb']],
        axis=0).astype(jnp.float32)                                   # (232, 1)

    return (w0, w20, w11, w21, w12, w22, fcw, biases)


def spatial_ext_tcn_forward(x, params):
    """x: (B, INPUT_SIZE, *spatial) -> (B, OUTPUT_SIZE), mirroring the torch forward."""
    B = x.shape[0]
    xf = x.reshape(B, INPUT_SIZE, -1).astype(jnp.float32)   # torch.reshape(x, (B, input_size, -1))
    L = xf.shape[-1]

    # Batches per lane block: TN = nb*L must be a multiple of 128 (lane-dense,
    # (8,128)-divisible) and a multiple of L (no batch straddles a block edge).
    base_nb = int(np.lcm(L, 128)) // L
    if base_nb >= B:
        nb = B                                    # single block == full array (no tiling constraint)
    else:
        nb = base_nb
        # grow toward ~512 lanes per block, but keep >= 2 blocks for megacore sharding
        while nb * 2 * L <= 512 and (B + 2 * nb - 1) // (2 * nb) >= 2:
            nb *= 2
    num_blocks = (B + nb - 1) // nb
    B_pad = num_blocks * nb
    TN = nb * L
    N_pad = B_pad * L

    # lane-pack: (B, C, L) -> (C, B*L), column index = b*L + t
    xp = jnp.transpose(xf, (1, 0, 2)).reshape(INPUT_SIZE, B * L)
    if N_pad != B * L:
        xp = jnp.pad(xp, ((0, 0), (0, N_pad - B * L)))

    weights = _prepare_weights(params)

    def wspec(a):
        nd = a.ndim
        return pl.BlockSpec(a.shape, lambda i, _nd=nd: (0,) * _nd)

    out = pl.pallas_call(
        functools.partial(_tcn_kernel, L=L),
        out_shape=jax.ShapeDtypeStruct((OUTPUT_SIZE, N_pad), jnp.float32),
        grid=(num_blocks,),
        in_specs=[pl.BlockSpec((INPUT_SIZE, TN), lambda i: (0, i))]
                 + [wspec(a) for a in weights],
        out_specs=pl.BlockSpec((OUTPUT_SIZE, TN), lambda i: (0, i)),
        compiler_params=pltpu.CompilerParams(dimension_semantics=("parallel",)),
    )(xp, *weights)

    # last time step of every batch segment, then (B, OUTPUT_SIZE)
    out = out[:, L - 1::L]          # (OUTPUT_SIZE, B_pad)
    return out[:, :B].T


def init_params(key):
    """Deterministic synthetic weights (weight_norm folded into effective conv weights)."""
    ks = list(jax.random.split(key, 16))

    def nrm(k, shape, scale=0.05):
        return (scale * jax.random.normal(k, shape)).astype(jnp.float32)

    p = {
        # level 0: in=128 -> out=32, dilation 1, plus 1x1 downsample
        'w10': nrm(ks[0], (2, HIDDEN, INPUT_SIZE)),
        'b10': nrm(ks[1], (HIDDEN, 1)),
        'w20': nrm(ks[2], (2, HIDDEN, HIDDEN)),
        'b20': nrm(ks[3], (HIDDEN, 1)),
        'dw0': nrm(ks[4], (1, HIDDEN, INPUT_SIZE)),
        'db0': nrm(ks[5], (HIDDEN, 1)),
        # level 1: 32 -> 32, dilation 2 (no downsample)
        'w11': nrm(ks[6], (2, HIDDEN, HIDDEN)),
        'b11': nrm(ks[7], (HIDDEN, 1)),
        'w21': nrm(ks[8], (2, HIDDEN, HIDDEN)),
        'b21': nrm(ks[9], (HIDDEN, 1)),
        # level 2: 32 -> 32, dilation 4 (no downsample)
        'w12': nrm(ks[10], (2, HIDDEN, HIDDEN)),
        'b12': nrm(ks[11], (HIDDEN, 1)),
        'w22': nrm(ks[12], (2, HIDDEN, HIDDEN)),
        'b22': nrm(ks[13], (HIDDEN, 1)),
        # fc: Linear(32 -> 8)
        'fcw': nrm(ks[14], (OUTPUT_SIZE, HIDDEN), scale=0.1),
        'fcb': nrm(ks[15], (OUTPUT_SIZE, 1), scale=0.1),
    }
    return p


def reference_forward(x, params):
    """Pure-JAX f32 reference mirroring the PyTorch semantics exactly."""
    B = x.shape[0]
    h = x.reshape(B, INPUT_SIZE, -1).astype(jnp.float32)
    L = h.shape[-1]

    def conv(h, w, b, d):
        h_shift = jnp.pad(h, ((0, 0), (0, 0), (d, 0)))[:, :, :L]
        y = jnp.einsum('oc,bcl->bol', w[1], h)
        y = y + jnp.einsum('oc,bcl->bol', w[0], h_shift)
        return y + b[None]

    def block(h, w1, b1, w2, b2, d, dw=None, db=None):
        out = jnp.maximum(conv(h, w1, b1, d), 0.0)
        out = jnp.maximum(conv(out, w2, b2, d), 0.0)
        if dw is None:
            res = h
        else:
            res = jnp.einsum('oc,bcl->bol', dw[0], h) + db[None]
        return jnp.maximum(out + res, 0.0)

    h = block(h, params['w10'], params['b10'], params['w20'], params['b20'],
              DILATIONS[0], params['dw0'], params['db0'])
    h = block(h, params['w11'], params['b11'], params['w21'], params['b21'], DILATIONS[1])
    h = block(h, params['w12'], params['b12'], params['w22'], params['b22'], DILATIONS[2])
    h_last = h[:, :, -1]                                  # (B, HIDDEN)
    return h_last @ params['fcw'].T + params['fcb'][:, 0]


if __name__ == "__main__":
    key = jax.random.PRNGKey(0)
    kx, kp = jax.random.split(key)

    # x as the module would see it before its internal reshape: (B, input_size, H, W)
    # B=16 with a 4x4 spatial grid -> L=16, so lane blocks of 8 batches are 128-lane dense
    # and the grid has 2 "parallel" blocks (feeds both TCs on v7x).
    x = jax.random.normal(kx, (16, INPUT_SIZE, 4, 4), dtype=jnp.float32)
    params = init_params(kp)

    out = spatial_ext_tcn_forward(x, params)
    out = jax.block_until_ready(out)
    assert out.shape == (16, OUTPUT_SIZE)

    ref = reference_forward(x, params)
    # bf16 MXU operands (f32 accumulate) -> slightly looser tolerance than pure f32.
    np.testing.assert_allclose(np.asarray(out), np.asarray(ref), rtol=5e-2, atol=2e-2)

    print("KERNEL_OK")
</pallas_src>

<mosaic_0001>
module attributes {stable_mosaic.version = 11 : i64} {
  func.func @_tcn_kernel(%arg0: i32, %arg1: memref<128x128xf32, #tpu.memory_space<vmem>>, %arg2: memref<64x256xbf16, #tpu.memory_space<vmem>>, %arg3: memref<32x64xbf16, #tpu.memory_space<vmem>>, %arg4: memref<32x64xbf16, #tpu.memory_space<vmem>>, %arg5: memref<32x64xbf16, #tpu.memory_space<vmem>>, %arg6: memref<32x64xbf16, #tpu.memory_space<vmem>>, %arg7: memref<32x64xbf16, #tpu.memory_space<vmem>>, %arg8: memref<8x32xbf16, #tpu.memory_space<vmem>>, %arg9: memref<232x1xf32, #tpu.memory_space<vmem>>, %arg10: memref<8x128xf32, #tpu.memory_space<vmem>>) attributes {dimension_semantics = [#tpu.dimension_semantics<parallel>], iteration_bounds = array<i64: 2>, scalar_prefetch = 0 : i64, scratch_operands = 0 : i64, tpu.core_type = #tpu.core_type<tc>, window_params = [{transform_indices = @transform_0, window_bounds = array<i64: 128, 128>}, {pipeline_mode = #tpu.pipeline_mode<synchronous>, transform_indices = @transform_1, window_bounds = array<i64: 64, 256>}, {pipeline_mode = #tpu.pipeline_mode<synchronous>, transform_indices = @transform_2, window_bounds = array<i64: 32, 64>}, {pipeline_mode = #tpu.pipeline_mode<synchronous>, transform_indices = @transform_3, window_bounds = array<i64: 32, 64>}, {pipeline_mode = #tpu.pipeline_mode<synchronous>, transform_indices = @transform_4, window_bounds = array<i64: 32, 64>}, {pipeline_mode = #tpu.pipeline_mode<synchronous>, transform_indices = @transform_5, window_bounds = array<i64: 32, 64>}, {pipeline_mode = #tpu.pipeline_mode<synchronous>, transform_indices = @transform_6, window_bounds = array<i64: 32, 64>}, {pipeline_mode = #tpu.pipeline_mode<synchronous>, transform_indices = @transform_7, window_bounds = array<i64: 8, 32>}, {pipeline_mode = #tpu.pipeline_mode<synchronous>, transform_indices = @transform_8, window_bounds = array<i64: 232, 1>}, {transform_indices = @transform_9, window_bounds = array<i64: 8, 128>}]} {
    %c0 = arith.constant 0 : index
    %c0_0 = arith.constant 0 : index
    %0 = vector.load %arg1[%c0, %c0_0] : memref<128x128xf32, #tpu.memory_space<vmem>>, vector<128x128xf32>
    %c0_1 = arith.constant 0 : index
    %c0_2 = arith.constant 0 : index
    %1 = vector.load %arg9[%c0_1, %c0_2] : memref<232x1xf32, #tpu.memory_space<vmem>>, vector<232x1xf32>
    %2 = vector.extract_strided_slice %1 {offsets = [0, 0], sizes = [64, 1], strides = [1, 1]} : vector<232x1xf32> to vector<64x1xf32>
    %3 = vector.extract_strided_slice %1 {offsets = [64, 0], sizes = [32, 1], strides = [1, 1]} : vector<232x1xf32> to vector<32x1xf32>
    %4 = vector.extract_strided_slice %1 {offsets = [96, 0], sizes = [32, 1], strides = [1, 1]} : vector<232x1xf32> to vector<32x1xf32>
    %5 = vector.extract_strided_slice %1 {offsets = [128, 0], sizes = [32, 1], strides = [1, 1]} : vector<232x1xf32> to vector<32x1xf32>
    %6 = vector.extract_strided_slice %1 {offsets = [160, 0], sizes = [32, 1], strides = [1, 1]} : vector<232x1xf32> to vector<32x1xf32>
    %7 = vector.extract_strided_slice %1 {offsets = [192, 0], sizes = [32, 1], strides = [1, 1]} : vector<232x1xf32> to vector<32x1xf32>
    %8 = vector.extract_strided_slice %1 {offsets = [224, 0], sizes = [8, 1], strides = [1, 1]} : vector<232x1xf32> to vector<8x1xf32>
    %9 = tpu.iota {dimensions = array<i32: 1>} : vector<1x128xi32>
    %c16_i32 = arith.constant 16 : i32
    %c0_i32 = arith.constant 0 : i32
    %10 = arith.cmpi eq, %c16_i32, %c0_i32 : i32
    %c1_i32 = arith.constant 1 : i32
    %11 = arith.select %10, %c1_i32, %c16_i32 : i32
    %12 = vector.broadcast %11 : i32 to vector<1x128xi32>
    %13 = arith.remsi %9, %12 : vector<1x128xi32>
    %c0_i32_3 = arith.constant 0 : i32
    %14 = vector.broadcast %c0_i32_3 : i32 to vector<1x128xi32>
    %15 = arith.cmpi ne, %13, %14 : vector<1x128xi32>
    %c0_i32_4 = arith.constant 0 : i32
    %16 = vector.broadcast %c0_i32_4 : i32 to vector<1x128xi32>
    %17 = arith.cmpi slt, %13, %16 : vector<1x128xi32>
    %c0_i32_5 = arith.constant 0 : i32
    %18 = arith.cmpi slt, %11, %c0_i32_5 : i32
    %19 = vector.broadcast %18 : i1 to vector<1x128xi1>
    %20 = vector.broadcast %19 : vector<1x128xi1> to vector<1x128xi1>
    %21 = arith.xori %17, %20 : vector<1x128xi1>
    %22 = arith.andi %21, %15 : vector<1x128xi1>
    %23 = vector.broadcast %11 : i32 to vector<1x128xi32>
    %24 = arith.addi %13, %23 : vector<1x128xi32>
    %25 = arith.select %22, %24, %13 : vector<1x128xi1>, vector<1x128xi32>
    %c1_i32_6 = arith.constant 1 : i32
    %26 = vector.broadcast %c1_i32_6 : i32 to vector<1x128xi32>
    %27 = arith.cmpi sge, %25, %26 : vector<1x128xi32>
    %c2_i32 = arith.constant 2 : i32
    %28 = vector.broadcast %c2_i32 : i32 to vector<1x128xi32>
    %29 = arith.cmpi sge, %25, %28 : vector<1x128xi32>
    %c4_i32 = arith.constant 4 : i32
    %30 = vector.broadcast %c4_i32 : i32 to vector<1x128xi32>
    %31 = arith.cmpi sge, %25, %30 : vector<1x128xi32>
    %c1_i32_7 = arith.constant 1 : i32
    %32 = tpu.dynamic_rotate %0 by %c1_i32_7 dim 1 : vector<128x128xf32>, i32 -> vector<128x128xf32>
    %cst = arith.constant 0.000000e+00 : f32
    %33 = vector.shape_cast %27 : vector<1x128xi1> to vector<1x128xi1>
    %34 = vector.broadcast %33 : vector<1x128xi1> to vector<128x128xi1>
    %35 = vector.broadcast %cst : f32 to vector<128x128xf32>
    %36 = arith.select %34, %32, %35 : vector<128x128xi1>, vector<128x128xf32>
    %37 = tpu.concatenate %36, %0 in 0 : vector<128x128xf32>, vector<128x128xf32> -> vector<256x128xf32>
    %38 = arith.truncf %37 : vector<256x128xf32> to vector<256x128xbf16>
    %c0_8 = arith.constant 0 : index
    %c0_9 = arith.constant 0 : index
    %39 = vector.load %arg2[%c0_8, %c0_9] : memref<64x256xbf16, #tpu.memory_space<vmem>>, vector<64x256xbf16>
    %cst_10 = arith.constant dense<0.000000e+00> : vector<64x128xf32>
    %40 = tpu.matmul %39, %38, %cst_10 {dimension_numbers = #tpu.dot_dimension_numbers<[1], [0], [0], [1], [0, 0, 1, 1], [], []>} : vector<64x256xbf16>, vector<256x128xbf16>, vector<64x128xf32> -> vector<64x128xf32>
    %41 = vector.broadcast %2 : vector<64x1xf32> to vector<64x128xf32>
    %42 = arith.addf %40, %41 : vector<64x128xf32>
    %43 = vector.extract_strided_slice %42 {offsets = [0, 0], sizes = [32, 128], strides = [1, 1]} : vector<64x128xf32> to vector<32x128xf32>
    %cst_11 = arith.constant 0.000000e+00 : f32
    %44 = vector.broadcast %cst_11 : f32 to vector<32x128xf32>
    %45 = arith.maximumf %43, %44 : vector<32x128xf32>
    %46 = vector.extract_strided_slice %42 {offsets = [32, 0], sizes = [32, 128], strides = [1, 1]} : vector<64x128xf32> to vector<32x128xf32>
    %c1_i32_12 = arith.constant 1 : i32
    %47 = tpu.dynamic_rotate %45 by %c1_i32_12 dim 1 : vector<32x128xf32>, i32 -> vector<32x128xf32>
    %cst_13 = arith.constant 0.000000e+00 : f32
    %48 = vector.shape_cast %27 : vector<1x128xi1> to vector<1x128xi1>
    %49 = vector.broadcast %48 : vector<1x128xi1> to vector<32x128xi1>
    %50 = vector.broadcast %cst_13 : f32 to vector<32x128xf32>
    %51 = arith.select %49, %47, %50 : vector<32x128xi1>, vector<32x128xf32>
    %52 = tpu.concatenate %51, %45 in 0 : vector<32x128xf32>, vector<32x128xf32> -> vector<64x128xf32>
    %53 = arith.truncf %52 : vector<64x128xf32> to vector<64x128xbf16>
    %c0_14 = arith.constant 0 : index
    %c0_15 = arith.constant 0 : index
    %54 = vector.load %arg3[%c0_14, %c0_15] : memref<32x64xbf16, #tpu.memory_space<vmem>>, vector<32x64xbf16>
    %cst_16 = arith.constant dense<0.000000e+00> : vector<32x128xf32>
    %55 = tpu.matmul %54, %53, %cst_16 {dimension_numbers = #tpu.dot_dimension_numbers<[1], [0], [0], [1], [0, 0, 1, 1], [], []>} : vector<32x64xbf16>, vector<64x128xbf16>, vector<32x128xf32> -> vector<32x128xf32>
    %56 = vector.broadcast %3 : vector<32x1xf32> to vector<32x128xf32>
    %57 = arith.addf %55, %56 : vector<32x128xf32>
    %cst_17 = arith.constant 0.000000e+00 : f32
    %58 = vector.broadcast %cst_17 : f32 to vector<32x128xf32>
    %59 = arith.maximumf %57, %58 : vector<32x128xf32>
    %60 = arith.addf %59, %46 : vector<32x128xf32>
    %cst_18 = arith.constant 0.000000e+00 : f32
    %61 = vector.broadcast %cst_18 : f32 to vector<32x128xf32>
    %62 = arith.maximumf %60, %61 : vector<32x128xf32>
    %c2_i32_19 = arith.constant 2 : i32
    %63 = tpu.dynamic_rotate %62 by %c2_i32_19 dim 1 : vector<32x128xf32>, i32 -> vector<32x128xf32>
    %cst_20 = arith.constant 0.000000e+00 : f32
    %64 = vector.shape_cast %29 : vector<1x128xi1> to vector<1x128xi1>
    %65 = vector.broadcast %64 : vector<1x128xi1> to vector<32x128xi1>
    %66 = vector.broadcast %cst_20 : f32 to vector<32x128xf32>
    %67 = arith.select %65, %63, %66 : vector<32x128xi1>, vector<32x128xf32>
    %68 = tpu.concatenate %67, %62 in 0 : vector<32x128xf32>, vector<32x128xf32> -> vector<64x128xf32>
    %69 = arith.truncf %68 : vector<64x128xf32> to vector<64x128xbf16>
    %c0_21 = arith.constant 0 : index
    %c0_22 = arith.constant 0 : index
    %70 = vector.load %arg4[%c0_21, %c0_22] : memref<32x64xbf16, #tpu.memory_space<vmem>>, vector<32x64xbf16>
    %cst_23 = arith.constant dense<0.000000e+00> : vector<32x128xf32>
    %71 = tpu.matmul %70, %69, %cst_23 {dimension_numbers = #tpu.dot_dimension_numbers<[1], [0], [0], [1], [0, 0, 1, 1], [], []>} : vector<32x64xbf16>, vector<64x128xbf16>, vector<32x128xf32> -> vector<32x128xf32>
    %72 = vector.broadcast %4 : vector<32x1xf32> to vector<32x128xf32>
    %73 = arith.addf %71, %72 : vector<32x128xf32>
    %cst_24 = arith.constant 0.000000e+00 : f32
    %74 = vector.broadcast %cst_24 : f32 to vector<32x128xf32>
    %75 = arith.maximumf %73, %74 : vector<32x128xf32>
    %c2_i32_25 = arith.constant 2 : i32
    %76 = tpu.dynamic_rotate %75 by %c2_i32_25 dim 1 : vector<32x128xf32>, i32 -> vector<32x128xf32>
    %cst_26 = arith.constant 0.000000e+00 : f32
    %77 = vector.shape_cast %29 : vector<1x128xi1> to vector<1x128xi1>
    %78 = vector.broadcast %77 : vector<1x128xi1> to vector<32x128xi1>
    %79 = vector.broadcast %cst_26 : f32 to vector<32x128xf32>
    %80 = arith.select %78, %76, %79 : vector<32x128xi1>, vector<32x128xf32>
    %81 = tpu.concatenate %80, %75 in 0 : vector<32x128xf32>, vector<32x128xf32> -> vector<64x128xf32>
    %82 = arith.truncf %81 : vector<64x128xf32> to vector<64x128xbf16>
    %c0_27 = arith.constant 0 : index
    %c0_28 = arith.constant 0 : index
    %83 = vector.load %arg5[%c0_27, %c0_28] : memref<32x64xbf16, #tpu.memory_space<vmem>>, vector<32x64xbf16>
    %cst_29 = arith.constant dense<0.000000e+00> : vector<32x128xf32>
    %84 = tpu.matmul %83, %82, %cst_29 {dimension_numbers = #tpu.dot_dimension_numbers<[1], [0], [0], [1], [0, 0, 1, 1], [], []>} : vector<32x64xbf16>, vector<64x128xbf16>, vector<32x128xf32> -> vector<32x128xf32>
    %85 = vector.broadcast %5 : vector<32x1xf32> to vector<32x128xf32>
    %86 = arith.addf %84, %85 : vector<32x128xf32>
    %cst_30 = arith.constant 0.000000e+00 : f32
    %87 = vector.broadcast %cst_30 : f32 to vector<32x128xf32>
    %88 = arith.maximumf %86, %87 : vector<32x128xf32>
    %89 = arith.addf %88, %62 : vector<32x128xf32>
    %cst_31 = arith.constant 0.000000e+00 : f32
    %90 = vector.broadcast %cst_31 : f32 to vector<32x128xf32>
    %91 = arith.maximumf %89, %90 : vector<32x128xf32>
    %c4_i32_32 = arith.constant 4 : i32
    %92 = tpu.dynamic_rotate %91 by %c4_i32_32 dim 1 : vector<32x128xf32>, i32 -> vector<32x128xf32>
    %cst_33 = arith.constant 0.000000e+00 : f32
    %93 = vector.shape_cast %31 : vector<1x128xi1> to vector<1x128xi1>
    %94 = vector.broadcast %93 : vector<1x128xi1> to vector<32x128xi1>
    %95 = vector.broadcast %cst_33 : f32 to vector<32x128xf32>
    %96 = arith.select %94, %92, %95 : vector<32x128xi1>, vector<32x128xf32>
    %97 = tpu.concatenate %96, %91 in 0 : vector<32x128xf32>, vector<32x128xf32> -> vector<64x128xf32>
    %98 = arith.truncf %97 : vector<64x128xf32> to vector<64x128xbf16>
    %c0_34 = arith.constant 0 : index
    %c0_35 = arith.constant 0 : index
    %99 = vector.load %arg6[%c0_34, %c0_35] : memref<32x64xbf16, #tpu.memory_space<vmem>>, vector<32x64xbf16>
    %cst_36 = arith.constant dense<0.000000e+00> : vector<32x128xf32>
    %100 = tpu.matmul %99, %98, %cst_36 {dimension_numbers = #tpu.dot_dimension_numbers<[1], [0], [0], [1], [0, 0, 1, 1], [], []>} : vector<32x64xbf16>, vector<64x128xbf16>, vector<32x128xf32> -> vector<32x128xf32>
    %101 = vector.broadcast %6 : vector<32x1xf32> to vector<32x128xf32>
    %102 = arith.addf %100, %101 : vector<32x128xf32>
    %cst_37 = arith.constant 0.000000e+00 : f32
    %103 = vector.broadcast %cst_37 : f32 to vector<32x128xf32>
    %104 = arith.maximumf %102, %103 : vector<32x128xf32>
    %c4_i32_38 = arith.constant 4 : i32
    %105 = tpu.dynamic_rotate %104 by %c4_i32_38 dim 1 : vector<32x128xf32>, i32 -> vector<32x128xf32>
    %cst_39 = arith.constant 0.000000e+00 : f32
    %106 = vector.shape_cast %31 : vector<1x128xi1> to vector<1x128xi1>
    %107 = vector.broadcast %106 : vector<1x128xi1> to vector<32x128xi1>
    %108 = vector.broadcast %cst_39 : f32 to vector<32x128xf32>
    %109 = arith.select %107, %105, %108 : vector<32x128xi1>, vector<32x128xf32>
    %110 = tpu.concatenate %109, %104 in 0 : vector<32x128xf32>, vector<32x128xf32> -> vector<64x128xf32>
    %111 = arith.truncf %110 : vector<64x128xf32> to vector<64x128xbf16>
    %c0_40 = arith.constant 0 : index
    %c0_41 = arith.constant 0 : index
    %112 = vector.load %arg7[%c0_40, %c0_41] : memref<32x64xbf16, #tpu.memory_space<vmem>>, vector<32x64xbf16>
    %cst_42 = arith.constant dense<0.000000e+00> : vector<32x128xf32>
    %113 = tpu.matmul %112, %111, %cst_42 {dimension_numbers = #tpu.dot_dimension_numbers<[1], [0], [0], [1], [0, 0, 1, 1], [], []>} : vector<32x64xbf16>, vector<64x128xbf16>, vector<32x128xf32> -> vector<32x128xf32>
    %114 = vector.broadcast %7 : vector<32x1xf32> to vector<32x128xf32>
    %115 = arith.addf %113, %114 : vector<32x128xf32>
    %cst_43 = arith.constant 0.000000e+00 : f32
    %116 = vector.broadcast %cst_43 : f32 to vector<32x128xf32>
    %117 = arith.maximumf %115, %116 : vector<32x128xf32>
    %118 = arith.addf %117, %91 : vector<32x128xf32>
    %cst_44 = arith.constant 0.000000e+00 : f32
    %119 = vector.broadcast %cst_44 : f32 to vector<32x128xf32>
    %120 = arith.maximumf %118, %119 : vector<32x128xf32>
    %c0_45 = arith.constant 0 : index
    %c0_46 = arith.constant 0 : index
    %121 = vector.load %arg8[%c0_45, %c0_46] : memref<8x32xbf16, #tpu.memory_space<vmem>>, vector<8x32xbf16>
    %122 = arith.truncf %120 : vector<32x128xf32> to vector<32x128xbf16>
    %cst_47 = arith.constant dense<0.000000e+00> : vector<8x128xf32>
    %123 = tpu.matmul %121, %122, %cst_47 {dimension_numbers = #tpu.dot_dimension_numbers<[1], [0], [0], [1], [0, 0, 1, 1], [], []>} : vector<8x32xbf16>, vector<32x128xbf16>, vector<8x128xf32> -> vector<8x128xf32>
    %124 = vector.broadcast %8 : vector<8x1xf32> to vector<8x128xf32>
    %125 = arith.addf %123, %124 : vector<8x128xf32>
    %c0_48 = arith.constant 0 : index
    %c0_49 = arith.constant 0 : index
    %126 = vector.load %arg10[%c0_48, %c0_49] : memref<8x128xf32, #tpu.memory_space<vmem>>, vector<8x128xf32>
    tpu.vector_store %arg10[%c0_48, %c0_49], %125 {strides = array<i32>} : memref<8x128xf32, #tpu.memory_space<vmem>>, vector<8x128xf32>,
    return
  }
  func.func @transform_0(%arg0: i32) -> (i32, i32) {
    %c0_i32 = arith.constant 0 : i32
    %c0_i32_0 = arith.constant 0 : i32
    return %c0_i32, %arg0 : i32, i32
  }
  func.func @transform_1(%arg0: i32) -> (i32, i32) {
    %c0_i32 = arith.constant 0 : i32
    %c0_i32_0 = arith.constant 0 : i32
    %c0_i32_1 = arith.constant 0 : i32
    return %c0_i32, %c0_i32_0 : i32, i32
  }
  func.func @transform_2(%arg0: i32) -> (i32, i32) {
    %c0_i32 = arith.constant 0 : i32
    %c0_i32_0 = arith.constant 0 : i32
    %c0_i32_1 = arith.constant 0 : i32
    return %c0_i32, %c0_i32_0 : i32, i32
  }
  func.func @transform_3(%arg0: i32) -> (i32, i32) {
    %c0_i32 = arith.constant 0 : i32
    %c0_i32_0 = arith.constant 0 : i32
    %c0_i32_1 = arith.constant 0 : i32
    return %c0_i32, %c0_i32_0 : i32, i32
  }
  func.func @transform_4(%arg0: i32) -> (i32, i32) {
    %c0_i32 = arith.constant 0 : i32
    %c0_i32_0 = arith.constant 0 : i32
    %c0_i32_1 = arith.constant 0 : i32
    return %c0_i32, %c0_i32_0 : i32, i32
  }
  func.func @transform_5(%arg0: i32) -> (i32, i32) {
    %c0_i32 = arith.constant 0 : i32
    %c0_i32_0 = arith.constant 0 : i32
    %c0_i32_1 = arith.constant 0 : i32
    return %c0_i32, %c0_i32_0 : i32, i32
  }
  func.func @transform_6(%arg0: i32) -> (i32, i32) {
    %c0_i32 = arith.constant 0 : i32
    %c0_i32_0 = arith.constant 0 : i32
    %c0_i32_1 = arith.constant 0 : i32
    return %c0_i32, %c0_i32_0 : i32, i32
  }
  func.func @transform_7(%arg0: i32) -> (i32, i32) {
    %c0_i32 = arith.constant 0 : i32
    %c0_i32_0 = arith.constant 0 : i32
    %c0_i32_1 = arith.constant 0 : i32
    return %c0_i32, %c0_i32_0 : i32, i32
  }
  func.func @transform_8(%arg0: i32) -> (i32, i32) {
    %c0_i32 = arith.constant 0 : i32
    %c0_i32_0 = arith.constant 0 : i32
    %c0_i32_1 = arith.constant 0 : i32
    return %c0_i32, %c0_i32_0 : i32, i32
  }
  func.func @transform_9(%arg0: i32) -> (i32, i32) {
    %c0_i32 = arith.constant 0 : i32
    %c0_i32_0 = arith.constant 0 : i32
    return %c0_i32, %arg0 : i32, i32
  }
}

</mosaic_0001>

<llo_original>
// kernel: tpu_custom_call.1
$region0: #{tpu_custom_call.1}
  #allocation0 [shape = 'u32[]', space=smem, size = 0x4, offset = 0x4, fixed_abs, tag = 'smem constant byte address 0x4 - core index']
  #allocation1 [shape = 'u32[144,128]{1,0:T(1,128)}', space=vmem, size = 0x12000, scoped, tag = 'internal scratch']
  %s0 = inlined_call_operand.hbm [shape: f32[128,256], index: 0, kind: input, shape index: {}]
  %s1 = inlined_call_operand.vmem [shape: bf16[64,256], index: 1, kind: input, shape index: {}]
  %s2 = inlined_call_operand.vmem [shape: bf16[32,64], index: 2, kind: input, shape index: {}]
  %s3 = inlined_call_operand.vmem [shape: bf16[32,64], index: 3, kind: input, shape index: {}]
  %s4 = inlined_call_operand.vmem [shape: bf16[32,64], index: 4, kind: input, shape index: {}]
  %s5 = inlined_call_operand.vmem [shape: bf16[32,64], index: 5, kind: input, shape index: {}]
  %s6 = inlined_call_operand.vmem [shape: bf16[32,64], index: 6, kind: input, shape index: {}]
  %s7 = inlined_call_operand.vmem [shape: bf16[8,32], index: 7, kind: input, shape index: {}]
  %s8 = inlined_call_operand.vmem [shape: f32[232,1], index: 8, kind: input, shape index: {}]
  %s9 = inlined_call_operand.hbm [shape: f32[8,256], index: 9, kind: output, shape index: {}]
  %s10 = sld [smem:[#allocation0]]
  $region73: #{tpu_custom_call.1} parent=0
    _
  %s12 = ssub.s32 1, %s10
  %s13 = scalar_select 0, %s12, %s10
  $region1: #{tpu_custom_call.1} parent=0
    #allocation2 [shape = 'u8[131072]{0}', space=vmem, size = 0x20000, scoped, tag = 'input window, operand 0']
    #allocation3 [shape = 's32[2]{0}', space=sflag, size = 0x8, scoped, tag = 'scoped memory for tpu_custom_call.1']
    #allocation4 [shape = 's32[2]{0}', space=sflag, size = 0x8, scoped, tag = 'scoped memory for tpu_custom_call.1']
    #allocation5 [shape = 'u8[8192]{0}', space=vmem, size = 0x2000, scoped, tag = 'output window, operand 0']
    %14 = vsyncpa [#allocation3], 0
    %s15 = scalar_lea.sflag [#allocation3], 1
    %16 = vsyncpa %s15, 0
    %17 = vsyncpa [#allocation4], 0
    %s18 = scalar_lea.sflag [#allocation4], 1
    %19 = vsyncpa %s18, 0
    loop: start=0, step=1, limit=4
    $region2: #{tpu_custom_call.1} parent=1 // loop_pre_header
      _
    $region3: #{tpu_custom_call.1} parent=1 // loop_header
      %s21 = sphi 0, %s25
      %p22 = scmp.ge.s32.totalorder %s21, 4
      %s31 = sphi 0, %s33
      %s34 = sphi 0, %s31
      %s35 = sphi 0, %s34
      %s51 = sphi 0, %s35
      %s55 = sphi 0, %s55
      %s57 = sphi 0, %s55
      %s58 = sphi 0, %s57
      %s72 = sphi 0, %s58
      %s76 = sphi 0, %s76
      %s78 = sphi 0, %s76
      %s79 = sphi 0, %s78
      %s93 = sphi 0, %s79
      %s97 = sphi 0, %s97
      %s99 = sphi 0, %s97
      %s100 = sphi 0, %s99
      %s114 = sphi 0, %s100
      %s118 = sphi 0, %s118
      %s120 = sphi 0, %s118
      %s121 = sphi 0, %s120
      %s135 = sphi 0, %s121
      %s139 = sphi 0, %s139
      %s141 = sphi 0, %s139
      %s142 = sphi 0, %s141
      %s156 = sphi 0, %s142
      %s160 = sphi 0, %s160
      %s162 = sphi 0, %s160
      %s163 = sphi 0, %s162
      %s177 = sphi 0, %s163
      %s181 = sphi 0, %s181
      %s183 = sphi 0, %s181
      %s184 = sphi 0, %s183
      %s198 = sphi 0, %s184
      %s202 = sphi 0, %s202
      %s204 = sphi 0, %s202
      %s205 = sphi 0, %s204
      %s219 = sphi 0, %s205
      %s225 = sphi 0, %s227
      %s228 = sphi 0, %s225
      %s229 = sphi 0, %s228
      %s245 = sphi 0, %s229
    $region4: #{tpu_custom_call.1} parent=1 // loop_header_branch
      %24 = sbr.rel (%p22) target = $region8
    $region5: #{tpu_custom_call.1} parent=1 // loop_body
      %s26 = ssub.s32 %s21, 1
      %s27 = ssub.s32 %s21, 2
      %s28 = sadd.s32 %s21, 1
      %s29 = ssub.s32 %s21, %s28
      %p30 = scmp.eq.s32.totalorder %s29, 0
      %s32 = sadd.s32 %s31, 1
      %s33 = scalar_select %p30, %s31, %s32
      %p36 = pneg %p30
      %p37 = scmp.eq.s32.totalorder %s21, 1
      %p38 = por %p36, %p37
      %p39 = scmp.ne.s32.totalorder %s31, %s34
      %p40 = scmp.eq.s32.totalorder %s21, 0
      %p41 = por %p39, %p40
      %p42 = scmp.ne.s32.totalorder %s31, %s34
      %p43 = scmp.eq.s32.totalorder %s26, 1
      %p44 = por %p42, %p43
      %p45 = scmp.ne.s32.totalorder %s34, %s35
      %p46 = scmp.eq.s32.totalorder %s26, 0
      %p47 = por %p45, %p46
      %p48 = scmp.ne.s32.totalorder %s34, %s35
      %p49 = scmp.eq.s32.totalorder %s27, 1
      %p50 = por %p48, %p49
      %p52 = scmp.ne.s32.totalorder %s35, %s51
      %p53 = scmp.eq.s32.totalorder %s27, 0
      %p54 = por %p52, %p53
      %s56 = sadd.s32 %s55, 1
      %p59 = scmp.eq.s32.totalorder %s21, 1
      %p60 = scmp.ne.s32.totalorder %s55, %s57
      %p61 = scmp.eq.s32.totalorder %s21, 0
      %p62 = por %p60, %p61
      %p63 = scmp.ne.s32.totalorder %s55, %s57
      %p64 = scmp.eq.s32.totalorder %s26, 1
      %p65 = por %p63, %p64
      %p66 = scmp.ne.s32.totalorder %s57, %s58
      %p67 = scmp.eq.s32.totalorder %s26, 0
      %p68 = por %p66, %p67
      %p69 = scmp.ne.s32.totalorder %s57, %s58
      %p70 = scmp.eq.s32.totalorder %s27, 1
      %p71 = por %p69, %p70
      %p73 = scmp.ne.s32.totalorder %s58, %s72
      %p74 = scmp.eq.s32.totalorder %s27, 0
      %p75 = por %p73, %p74
      %s77 = sadd.s32 %s76, 1
      %p80 = scmp.eq.s32.totalorder %s21, 1
      %p81 = scmp.ne.s32.totalorder %s76, %s78
      %p82 = scmp.eq.s32.totalorder %s21, 0
      %p83 = por %p81, %p82
      %p84 = scmp.ne.s32.totalorder %s76, %s78
      %p85 = scmp.eq.s32.totalorder %s26, 1
      %p86 = por %p84, %p85
      %p87 = scmp.ne.s32.totalorder %s78, %s79
      %p88 = scmp.eq.s32.totalorder %s26, 0
      %p89 = por %p87, %p88
      %p90 = scmp.ne.s32.totalorder %s78, %s79
      %p91 = scmp.eq.s32.totalorder %s27, 1
      %p92 = por %p90, %p91
      %p94 = scmp.ne.s32.totalorder %s79, %s93
      %p95 = scmp.eq.s32.totalorder %s27, 0
      %p96 = por %p94, %p95
      %s98 = sadd.s32 %s97, 1
      %p101 = scmp.eq.s32.totalorder %s21, 1
      %p102 = scmp.ne.s32.totalorder %s97, %s99
      %p103 = scmp.eq.s32.totalorder %s21, 0
      %p104 = por %p102, %p103
      %p105 = scmp.ne.s32.totalorder %s97, %s99
      %p106 = scmp.eq.s32.totalorder %s26, 1
      %p107 = por %p105, %p106
      %p108 = scmp.ne.s32.totalorder %s99, %s100
      %p109 = scmp.eq.s32.totalorder %s26, 0
      %p110 = por %p108, %p109
      %p111 = scmp.ne.s32.totalorder %s99, %s100
      %p112 = scmp.eq.s32.totalorder %s27, 1
      %p113 = por %p111, %p112
      %p115 = scmp.ne.s32.totalorder %s100, %s114
      %p116 = scmp.eq.s32.totalorder %s27, 0
      %p117 = por %p115, %p116
      %s119 = sadd.s32 %s118, 1
      %p122 = scmp.eq.s32.totalorder %s21, 1
      %p123 = scmp.ne.s32.totalorder %s118, %s120
      %p124 = scmp.eq.s32.totalorder %s21, 0
      %p125 = por %p123, %p124
      %p126 = scmp.ne.s32.totalorder %s118, %s120
      %p127 = scmp.eq.s32.totalorder %s26, 1
      %p128 = por %p126, %p127
      %p129 = scmp.ne.s32.totalorder %s120, %s121
      %p130 = scmp.eq.s32.totalorder %s26, 0
      %p131 = por %p129, %p130
      %p132 = scmp.ne.s32.totalorder %s120, %s121
      %p133 = scmp.eq.s32.totalorder %s27, 1
      %p134 = por %p132, %p133
      %p136 = scmp.ne.s32.totalorder %s121, %s135
      %p137 = scmp.eq.s32.totalorder %s27, 0
      %p138 = por %p136, %p137
      %s140 = sadd.s32 %s139, 1
      %p143 = scmp.eq.s32.totalorder %s21, 1
      %p144 = scmp.ne.s32.totalorder %s139, %s141
      %p145 = scmp.eq.s32.totalorder %s21, 0
      %p146 = por %p144, %p145
      %p147 = scmp.ne.s32.totalorder %s139, %s141
      %p148 = scmp.eq.s32.totalorder %s26, 1
      %p149 = por %p147, %p148
      %p150 = scmp.ne.s32.totalorder %s141, %s142
      %p151 = scmp.eq.s32.totalorder %s26, 0
      %p152 = por %p150, %p151
      %p153 = scmp.ne.s32.totalorder %s141, %s142
      %p154 = scmp.eq.s32.totalorder %s27, 1
      %p155 = por %p153, %p154
      %p157 = scmp.ne.s32.totalorder %s142, %s156
      %p158 = scmp.eq.s32.totalorder %s27, 0
      %p159 = por %p157, %p158
      %s161 = sadd.s32 %s160, 1
      %p164 = scmp.eq.s32.totalorder %s21, 1
      %p165 = scmp.ne.s32.totalorder %s160, %s162
      %p166 = scmp.eq.s32.totalorder %s21, 0
      %p167 = por %p165, %p166
      %p168 = scmp.ne.s32.totalorder %s160, %s162
      %p169 = scmp.eq.s32.totalorder %s26, 1
      %p170 = por %p168, %p169
      %p171 = scmp.ne.s32.totalorder %s162, %s163
      %p172 = scmp.eq.s32.totalorder %s26, 0
      %p173 = por %p171, %p172
      %p174 = scmp.ne.s32.totalorder %s162, %s163
      %p175 = scmp.eq.s32.totalorder %s27, 1
      %p176 = por %p174, %p175
      %p178 = scmp.ne.s32.totalorder %s163, %s177
      %p179 = scmp.eq.s32.totalorder %s27, 0
      %p180 = por %p178, %p179
      %s182 = sadd.s32 %s181, 1
      %p185 = scmp.eq.s32.totalorder %s21, 1
      %p186 = scmp.ne.s32.totalorder %s181, %s183
      %p187 = scmp.eq.s32.totalorder %s21, 0
      %p188 = por %p186, %p187
      %p189 = scmp.ne.s32.totalorder %s181, %s183
      %p190 = scmp.eq.s32.totalorder %s26, 1
      %p191 = por %p189, %p190
      %p192 = scmp.ne.s32.totalorder %s183, %s184
      %p193 = scmp.eq.s32.totalorder %s26, 0
      %p194 = por %p192, %p193
      %p195 = scmp.ne.s32.totalorder %s183, %s184
      %p196 = scmp.eq.s32.totalorder %s27, 1
      %p197 = por %p195, %p196
      %p199 = scmp.ne.s32.totalorder %s184, %s198
      %p200 = scmp.eq.s32.totalorder %s27, 0
      %p201 = por %p199, %p200
      %s203 = sadd.s32 %s202, 1
      %p206 = scmp.eq.s32.totalorder %s21, 1
      %p207 = scmp.ne.s32.totalorder %s202, %s204
      %p208 = scmp.eq.s32.totalorder %s21, 0
      %p209 = por %p207, %p208
      %p210 = scmp.ne.s32.totalorder %s202, %s204
      %p211 = scmp.eq.s32.totalorder %s26, 1
      %p212 = por %p210, %p211
      %p213 = scmp.ne.s32.totalorder %s204, %s205
      %p214 = scmp.eq.s32.totalorder %s26, 0
      %p215 = por %p213, %p214
      %p216 = scmp.ne.s32.totalorder %s204, %s205
      %p217 = scmp.eq.s32.totalorder %s27, 1
      %p218 = por %p216, %p217
      %p220 = scmp.ne.s32.totalorder %s205, %s219
      %p221 = scmp.eq.s32.totalorder %s27, 0
      %p222 = por %p220, %p221
      %s223 = ssub.s32 %s21, %s28
      %p224 = scmp.eq.s32.totalorder %s223, 0
      %s226 = sadd.s32 %s225, 1
      %s227 = scalar_select %p224, %s225, %s226
      %p230 = pneg %p224
      %p231 = scmp.eq.s32.totalorder %s21, 1
      %p232 = por %p230, %p231
      %p233 = scmp.ne.s32.totalorder %s225, %s228
      %p234 = scmp.eq.s32.totalorder %s21, 0
      %p235 = por %p233, %p234
      %p236 = scmp.ne.s32.totalorder %s225, %s228
      %p237 = scmp.eq.s32.totalorder %s26, 1
      %p238 = por %p236, %p237
      %p239 = scmp.ne.s32.totalorder %s228, %s229
      %p240 = scmp.eq.s32.totalorder %s26, 0
      %p241 = por %p239, %p240
      %p242 = scmp.ne.s32.totalorder %s228, %s229
      %p243 = scmp.eq.s32.totalorder %s27, 1
      %p244 = por %p242, %p243
      %p246 = scmp.ne.s32.totalorder %s229, %s245
      %p247 = scmp.eq.s32.totalorder %s27, 0
      %p248 = por %p246, %p247
      %p249 = scmp.le.s32.totalorder 1, %s21
      %p250 = scmp.lt.s32.totalorder %s21, 3
      %p251 = pnand %p249, %p250
      %p252 = pneg %p251
      // Predicated region
      $region9: #{tpu_custom_call.1} parent=5 // pred_check
        _
      $region10: #{tpu_custom_call.1} parent=5 // pred_check_branch
        %254 = sbr.rel (%p251) target = $region12
      $region11: #{tpu_custom_call.1} parent=5 // pred_region
        %s255 = ssub.s32 %s21, 1
        // Predicated region
        $region13: #{tpu_custom_call.1} parent=11 // pred_check
          %p256 = pneg %p68
        $region14: #{tpu_custom_call.1} parent=11 // pred_check_branch
          %258 = sbr.rel (%p256) target = $region16
        $region15: #{tpu_custom_call.1} parent=11 // pred_region
          _
        $region16: #{tpu_custom_call.1} parent=11 // pred_fallthru
          _
        // Predicated region
        $region17: #{tpu_custom_call.1} parent=11 // pred_check
          %p259 = pneg %p89
        $region18: #{tpu_custom_call.1} parent=11 // pred_check_branch
          %261 = sbr.rel (%p259) target = $region20
        $region19: #{tpu_custom_call.1} parent=11 // pred_region
          _
        $region20: #{tpu_custom_call.1} parent=11 // pred_fallthru
          _
        // Predicated region
        $region21: #{tpu_custom_call.1} parent=11 // pred_check
          %p262 = pneg %p110
        $region22: #{tpu_custom_call.1} parent=11 // pred_check_branch
          %264 = sbr.rel (%p262) target = $region24
        $region23: #{tpu_custom_call.1} parent=11 // pred_region
          _
        $region24: #{tpu_custom_call.1} parent=11 // pred_fallthru
          _
        // Predicated region
        $region25: #{tpu_custom_call.1} parent=11 // pred_check
          %p265 = pneg %p131
        $region26: #{tpu_custom_call.1} parent=11 // pred_check_branch
          %267 = sbr.rel (%p265) target = $region28
        $region27: #{tpu_custom_call.1} parent=11 // pred_region
          _
        $region28: #{tpu_custom_call.1} parent=11 // pred_fallthru
          _
        // Predicated region
        $region29: #{tpu_custom_call.1} parent=11 // pred_check
          %p268 = pneg %p152
        $region30: #{tpu_custom_call.1} parent=11 // pred_check_branch
          %270 = sbr.rel (%p268) target = $region32
        $region31: #{tpu_custom_call.1} parent=11 // pred_region
          _
        $region32: #{tpu_custom_call.1} parent=11 // pred_fallthru
          _
        // Predicated region
        $region33: #{tpu_custom_call.1} parent=11 // pred_check
          %p271 = pneg %p173
        $region34: #{tpu_custom_call.1} parent=11 // pred_check_branch
          %273 = sbr.rel (%p271) target = $region36
        $region35: #{tpu_custom_call.1} parent=11 // pred_region
          _
        $region36: #{tpu_custom_call.1} parent=11 // pred_fallthru
          _
        // Predicated region
        $region37: #{tpu_custom_call.1} parent=11 // pred_check
          %p274 = pneg %p194
        $region38: #{tpu_custom_call.1} parent=11 // pred_check_branch
          %276 = sbr.rel (%p274) target = $region40
        $region39: #{tpu_custom_call.1} parent=11 // pred_region
          _
        $region40: #{tpu_custom_call.1} parent=11 // pred_fallthru
          _
        // Predicated region
        $region41: #{tpu_custom_call.1} parent=11 // pred_check
          %p277 = pneg %p215
        $region42: #{tpu_custom_call.1} parent=11 // pred_check_branch
          %279 = sbr.rel (%p277) target = $region44
        $region43: #{tpu_custom_call.1} parent=11 // pred_region
          _
        $region44: #{tpu_custom_call.1} parent=11 // pred_fallthru
          _
      $region12: #{tpu_custom_call.1} parent=5 // pred_fallthru
        _
      %p280 = scmp.lt.s32.totalorder %s21, 2
      // Predicated region
      $region45: #{tpu_custom_call.1} parent=5 // pred_check
        %p281 = pneg %p280
      $region46: #{tpu_custom_call.1} parent=5 // pred_check_branch
        %283 = sbr.rel (%p281) target = $region48
      $region47: #{tpu_custom_call.1} parent=5 // pred_region
        // Predicated region
        $region49: #{tpu_custom_call.1} parent=47 // pred_check
          %p284 = pneg %p41
        $region50: #{tpu_custom_call.1} parent=47 // pred_check_branch
          %286 = sbr.rel (%p284) target = $region52
        $region51: #{tpu_custom_call.1} parent=47 // pred_region
          %s287 = sand.u32 %s31, 1
          %s288 = scalar_lea.sflag [#allocation3], %s287
          %s289 = sand.u32 %s31, 1
          %s290 = smul.addr %s289, 128
          %s291 = scalar_lea.vmem [#allocation2], %s290
          %s293 = ssub.s32 2048, 2048
          %294 = vsyncadd %s288, %s293
          %s295 = smul.addr %s21, 128
          %s296 = scalar_lea.hbm %s0, %s295
          %s297 = sshll.u32 %s291, 4
          %s298 = int_to_ptr.vmem [resolvable:$true] %s297
          %303 = dma.hbm_to_vmem [thread:$0]  %s296, 2048, %s298, %s288, 256, 128, 8
        $region52: #{tpu_custom_call.1} parent=47 // pred_fallthru
          _
      $region48: #{tpu_custom_call.1} parent=5 // pred_fallthru
        _
      %p304 = scmp.le.s32.totalorder 1, %s21
      %p305 = scmp.lt.s32.totalorder %s21, 3
      %p306 = pnand %p304, %p305
      %p307 = pneg %p306
      // Predicated region
      $region53: #{tpu_custom_call.1} parent=5 // pred_check
        _
      $region54: #{tpu_custom_call.1} parent=5 // pred_check_branch
        %309 = sbr.rel (%p306) target = $region56
      $region55: #{tpu_custom_call.1} parent=5 // pred_region
        %s310 = ssub.s32 %s21, 1
        %s311 = sand.u32 %s34, 1
        %s312 = scalar_lea.sflag [#allocation3], %s311
        %s313 = sand.u32 %s34, 1
        %s314 = smul.addr %s313, 128
        %s315 = scalar_lea.vmem [#allocation2], %s314
        // Predicated region
        $region57: #{tpu_custom_call.1} parent=55 // pred_check
          %p316 = pneg %p47
        $region58: #{tpu_custom_call.1} parent=55 // pred_check_branch
          %318 = sbr.rel (%p316) target = $region60
        $region59: #{tpu_custom_call.1} parent=55 // pred_region
          %319 = dma.done %s312, 2048
        $region60: #{tpu_custom_call.1} parent=55 // pred_fallthru
          _
        %s320 = sand.u32 %s34, 1
        %s321 = scalar_lea.sflag [#allocation3], %s320
        %s322 = sand.u32 %s34, 1
        %s323 = smul.addr %s322, 128
        %s324 = scalar_lea.vmem [#allocation2], %s323
        %p325 = pneg %p47
        %p326 = pneg %p44
        %p327 = pneg %p68
        %p328 = pneg %p65
        %p329 = pneg %p89
        %p330 = pneg %p86
        %p331 = pneg %p110
        %p332 = pneg %p107
        %p333 = pneg %p131
        %p334 = pneg %p128
        %p335 = pneg %p152
        %p336 = pneg %p149
        %p337 = pneg %p173
        %p338 = pneg %p170
        %p339 = pneg %p194
        %p340 = pneg %p191
        %p341 = pneg %p215
        %p342 = pneg %p212
        %p343 = pneg %p241
        %p344 = pneg %p238
        %s345 = sand.u32 %s228, 1
        %s346 = scalar_lea.sflag [#allocation4], %s345
        %s347 = sand.u32 %s228, 1
        %s348 = smul.addr %s347, 8
        %s349 = scalar_lea.vmem [#allocation5], %s348
        %v351 = vld [vmem:[%s315] sm:$0xff]
        %v352 = vld [vmem:[%s315 + $0x8] sm:$0xff]
        %v353 = vld [vmem:[%s315 + $0x10] sm:$0xff]
        %v354 = vld [vmem:[%s315 + $0x18] sm:$0xff]
        %v355 = vld [vmem:[%s315 + $0x20] sm:$0xff]
        %v356 = vld [vmem:[%s315 + $0x28] sm:$0xff]
        %v357 = vld [vmem:[%s315 + $0x30] sm:$0xff]
        %v358 = vld [vmem:[%s315 + $0x38] sm:$0xff]
        %v359 = vld [vmem:[%s315 + $0x40] sm:$0xff]
        %v360 = vld [vmem:[%s315 + $0x48] sm:$0xff]
        %v361 = vld [vmem:[%s315 + $0x50] sm:$0xff]
        %v362 = vld [vmem:[%s315 + $0x58] sm:$0xff]
        %v363 = vld [vmem:[%s315 + $0x60] sm:$0xff]
        %v364 = vld [vmem:[%s315 + $0x68] sm:$0xff]
        %v365 = vld [vmem:[%s315 + $0x70] sm:$0xff]
        %v366 = vld [vmem:[%s315 + $0x78] sm:$0xff]
        %v367 = vld [vmem:[%s8] sm:$0xff]
        %v368 = vld [vmem:[%s8 + $0x8] sm:$0xff]
        %v369 = vld [vmem:[%s8 + $0x10] sm:$0xff]
        %v370 = vld [vmem:[%s8 + $0x18] sm:$0xff]
        %v371 = vld [vmem:[%s8 + $0x20] sm:$0xff]
        %v372 = vld [vmem:[%s8 + $0x28] sm:$0xff]
        %v373 = vld [vmem:[%s8 + $0x30] sm:$0xff]
        %v374 = vld [vmem:[%s8 + $0x38] sm:$0xff]
        %v375 = vld [vmem:[%s8 + $0x40] sm:$0xff]
        %v376 = vld [vmem:[%s8 + $0x48] sm:$0xff]
        %v377 = vld [vmem:[%s8 + $0x50] sm:$0xff]
        %v378 = vld [vmem:[%s8 + $0x58] sm:$0xff]
        %v379 = vld [vmem:[%s8 + $0x60] sm:$0xff]
        %v380 = vld [vmem:[%s8 + $0x68] sm:$0xff]
        %v381 = vld [vmem:[%s8 + $0x70] sm:$0xff]
        %v382 = vld [vmem:[%s8 + $0x78] sm:$0xff]
        %v383 = vld [vmem:[%s8 + $0x80] sm:$0xff]
        %v384 = vld [vmem:[%s8 + $0x88] sm:$0xff]
        %v385 = vld [vmem:[%s8 + $0x90] sm:$0xff]
        %v386 = vld [vmem:[%s8 + $0x98] sm:$0xff]
        %v387 = vld [vmem:[%s8 + $0xa0] sm:$0xff]
        %v388 = vld [vmem:[%s8 + $0xa8] sm:$0xff]
        %v389 = vld [vmem:[%s8 + $0xb0] sm:$0xff]
        %v390 = vld [vmem:[%s8 + $0xb8] sm:$0xff]
        %v391 = vld [vmem:[%s8 + $0xc0] sm:$0xff]
        %v392 = vld [vmem:[%s8 + $0xc8] sm:$0xff]
        %v393 = vld [vmem:[%s8 + $0xd0] sm:$0xff]
        %v394 = vld [vmem:[%s8 + $0xd8] sm:$0xff]
        %v395 = vld [vmem:[%s8 + $0xe0] sm:$0xff]
        %v396 = vlaneseq
        %v397 = vand.u32 %v396, 127
        %vm398 = vcmp.lt.s32.totalorder %v397, 0
        %v399 = vsub.s32 0, %v397
        %v400 = vsel %vm398, %v399, %v397
        %v401 = vshrl.u32 %v400, 4
        %v402 = vand.u32 %v400, 15
        %v403 = vsub.s32 0, %v402
        %v404 = vsel %vm398, %v403, %v402
        %vm405 = vcmp.ne.s32.totalorder %v404, 0
        %vm406 = vcmp.lt.s32.totalorder %v404, 0
        %vm407 = vmand %vm406, %vm405
        %v408 = vadd.s32 %v404, 16
        %v409 = vsel %vm407, %v408, %v404
        %vm410 = vcmp.ge.s32.totalorder %v409, 1
        %vm411 = vcmp.ge.s32.totalorder %v409, 2
        %vm412 = vcmp.ge.s32.totalorder %v409, 4
        %413 = vrot.lane.b32.xlu0 %v351, 1
        %v414 = vpop.permute.xlu0 %413
        %415 = vrot.lane.b32.xlu0 %v352, 1
        %v416 = vpop.permute.xlu0 %415
        %417 = vrot.lane.b32.xlu0 %v353, 1
        %v418 = vpop.permute.xlu0 %417
        %419 = vrot.lane.b32.xlu0 %v354, 1
        %v420 = vpop.permute.xlu0 %419
        %421 = vrot.lane.b32.xlu0 %v355, 1
        %v422 = vpop.permute.xlu0 %421
        %423 = vrot.lane.b32.xlu0 %v356, 1
        %v424 = vpop.permute.xlu0 %423
        %425 = vrot.lane.b32.xlu0 %v357, 1
        %v426 = vpop.permute.xlu0 %425
        %427 = vrot.lane.b32.xlu0 %v358, 1
        %v428 = vpop.permute.xlu0 %427
        %429 = vrot.lane.b32.xlu0 %v359, 1
        %v430 = vpop.permute.xlu0 %429
        %431 = vrot.lane.b32.xlu0 %v360, 1
        %v432 = vpop.permute.xlu0 %431
        %433 = vrot.lane.b32.xlu0 %v361, 1
        %v434 = vpop.permute.xlu0 %433
        %435 = vrot.lane.b32.xlu0 %v362, 1
        %v436 = vpop.permute.xlu0 %435
        %437 = vrot.lane.b32.xlu0 %v363, 1
        %v438 = vpop.permute.xlu0 %437
        %439 = vrot.lane.b32.xlu0 %v364, 1
        %v440 = vpop.permute.xlu0 %439
        %441 = vrot.lane.b32.xlu0 %v365, 1
        %v442 = vpop.permute.xlu0 %441
        %443 = vrot.lane.b32.xlu0 %v366, 1
        %v444 = vpop.permute.xlu0 %443
        %v445 = vsel %vm410, 1, 0
        %vm446 = vcmp.eq.s32.totalorder %v445, 1
        %v447 = vsel %vm446, %v414, 0.0
        %v448 = vsel %vm446, %v416, 0.0
        %v449 = vsel %vm446, %v418, 0.0
        %v450 = vsel %vm446, %v420, 0.0
        %v451 = vsel %vm446, %v422, 0.0
        %v452 = vsel %vm446, %v424, 0.0
        %v453 = vsel %vm446, %v426, 0.0
        %v454 = vsel %vm446, %v428, 0.0
        %v455 = vsel %vm446, %v430, 0.0
        %v456 = vsel %vm446, %v432, 0.0
        %v457 = vsel %vm446, %v434, 0.0
        %v458 = vsel %vm446, %v436, 0.0
        %v459 = vsel %vm446, %v438, 0.0
        %v460 = vsel %vm446, %v440, 0.0
        %v461 = vsel %vm446, %v442, 0.0
        %v462 = vsel %vm446, %v444, 0.0
        %v463 = vpack.c.bf16 %v448, %v447
        %v464 = vpack.c.bf16 %v450, %v449
        %v465 = vpack.c.bf16 %v452, %v451
        %v466 = vpack.c.bf16 %v454, %v453
        %v467 = vpack.c.bf16 %v456, %v455
        %v468 = vpack.c.bf16 %v458, %v457
        %v469 = vpack.c.bf16 %v460, %v459
        %v470 = vpack.c.bf16 %v462, %v461
        %v471 = vpack.c.bf16 %v352, %v351
        %v472 = vpack.c.bf16 %v354, %v353
        %v473 = vpack.c.bf16 %v356, %v355
        %v474 = vpack.c.bf16 %v358, %v357
        %v475 = vpack.c.bf16 %v360, %v359
        %v476 = vpack.c.bf16 %v362, %v361
        %v477 = vpack.c.bf16 %v364, %v363
        %v478 = vpack.c.bf16 %v366, %v365
        %v479 = vld [vmem:[%s1] sm:$0xff]
        %v480 = vld [vmem:[%s1 + $0x8] sm:$0xff]
        %v481 = vld [vmem:[%s1 + $0x10] sm:$0xff]
        %v482 = vld [vmem:[%s1 + $0x18] sm:$0xff]
        %v483 = vld [vmem:[%s1 + $0x20] sm:$0xff]
        %v484 = vld [vmem:[%s1 + $0x28] sm:$0xff]
        %v485 = vld [vmem:[%s1 + $0x30] sm:$0xff]
        %v486 = vld [vmem:[%s1 + $0x38] sm:$0xff]
        %488 = vset.pattern.permute.xlu0 0
        %489 = vperm.xlu0 %488, %v367
        %v490 = vpop.permute.xlu0 %489
        %493 = vset.pattern.permute.xlu0 0
        %494 = vperm.xlu0 %493, %v368
        %v495 = vpop.permute.xlu0 %494
        %498 = vset.pattern.permute.xlu0 0
        %499 = vperm.xlu0 %498, %v369
        %v500 = vpop.permute.xlu0 %499
        %503 = vset.pattern.permute.xlu0 0
        %504 = vperm.xlu0 %503, %v370
        %v505 = vpop.permute.xlu0 %504
        %508 = vset.pattern.permute.xlu0 0
        %509 = vperm.xlu0 %508, %v371
        %v510 = vpop.permute.xlu0 %509
        %513 = vset.pattern.permute.xlu0 0
        %514 = vperm.xlu0 %513, %v372
        %v515 = vpop.permute.xlu0 %514
        %518 = vset.pattern.permute.xlu0 0
        %519 = vperm.xlu0 %518, %v373
        %v520 = vpop.permute.xlu0 %519
        %523 = vset.pattern.permute.xlu0 0
        %524 = vperm.xlu0 %523, %v374
        %v525 = vpop.permute.xlu0 %524
        %v535 = vunpack.c.l.b16 %v479
        %v536 = vunpack.c.h.b16 %v479
        %v537 = vunpack.c.l.b16 %v480
        %v538 = vunpack.c.h.b16 %v480
        %v539 = vunpack.c.l.b16 %v481
        %v540 = vunpack.c.h.b16 %v481
        %v541 = vunpack.c.l.b16 %v482
        %v542 = vunpack.c.h.b16 %v482
        %v543 = vunpack.c.l.b16 %v483
        %v544 = vunpack.c.h.b16 %v483
        %v545 = vunpack.c.l.b16 %v484
        %v546 = vunpack.c.h.b16 %v484
        %v547 = vunpack.c.l.b16 %v485
        %v548 = vunpack.c.h.b16 %v485
        %v549 = vunpack.c.l.b16 %v486
        %v550 = vunpack.c.h.b16 %v486
        %v551 = vpack.c.b16 %v537, %v535
        %v552 = vpack.c.b16 %v538, %v536
        %v553 = vpack.c.b16 %v541, %v539
        %v554 = vpack.c.b16 %v542, %v540
        %v555 = vpack.c.b16 %v545, %v543
        %v556 = vpack.c.b16 %v546, %v544
        %v557 = vpack.c.b16 %v549, %v547
        %v558 = vpack.c.b16 %v550, %v548
        %567 = vmatprep.subr.bf16.mxu0 0
        %568 = vmatpush1.bf16.msra.mxu0 %v463
        %569 = vmatprep.subr.bf16.mxu0 0
        %570 = vmatpush1.bf16.msra.mxu0 %v464
        %571 = vmatprep.subr.bf16.mxu0 0
        %572 = vmatpush1.bf16.msra.mxu0 %v465
        %573 = vmatprep.subr.bf16.mxu0 0
        %574 = vmatpush1.bf16.msra.mxu0 %v466
        %575 = vmatprep.subr.bf16.mxu0 0
        %576 = vmatpush1.bf16.msra.mxu0 %v467
        %577 = vmatprep.subr.bf16.mxu0 0
        %578 = vmatpush1.bf16.msra.mxu0 %v468
        %579 = vmatprep.subr.bf16.mxu0 0
        %580 = vmatpush1.bf16.msra.mxu0 %v469
        %581 = vmatprep.subr.bf16.mxu0 0
        %582 = vmatpush1.bf16.msra.mxu0 %v470
        %583 = vmatprep.subr.bf16.mxu0 0
        %584 = vmatpush1.bf16.msra.mxu0 %v471
        %585 = vmatprep.subr.bf16.mxu0 0
        %586 = vmatpush1.bf16.msra.mxu0 %v472
        %587 = vmatprep.subr.bf16.mxu0 0
        %588 = vmatpush1.bf16.msra.mxu0 %v473
        %589 = vmatprep.subr.bf16.mxu0 0
        %590 = vmatpush1.bf16.msra.mxu0 %v474
        %591 = vmatprep.subr.bf16.mxu0 0
        %592 = vmatpush1.bf16.msra.mxu0 %v475
        %593 = vmatprep.subr.bf16.mxu0 0
        %594 = vmatpush1.bf16.msra.mxu0 %v476
        %595 = vmatprep.subr.bf16.mxu0 0
        %596 = vmatpush1.bf16.msra.mxu0 %v477
        %597 = vmatprep.subr.bf16.mxu0 0
        %598 = vmatpush1.bf16.msra.mxu0 %v478
        %599 = vmatprep.mubr.bf16.mxu0 %v552
        %600 = vmatmul.mubr.bf16.gmra.mrb[0].mxu0 %v551
        %v601 = vpop.f32.mrb[0].mxu0
        %v602 = vadd.f32 %v490, %v601
        %v603 = vpop.f32.mrb[0].mxu0
        %v604 = vpop.f32.mrb[0].mxu0
        %v605 = vadd.f32 %v495, %v604
        %v606 = vpop.f32.mrb[0].mxu0
        %607 = vmatprep.mubr.bf16.mxu0 %v554
        %608 = vmatmul.mubr.bf16.gmra.mrb[0].mxu0 %v553
        %v609 = vpop.f32.mrb[0].mxu0
        %v610 = vadd.f32 %v500, %v609
        %v611 = vpop.f32.mrb[0].mxu0
        %v612 = vpop.f32.mrb[0].mxu0
        %v613 = vadd.f32 %v505, %v612
        %v614 = vpop.f32.mrb[0].mxu0
        %615 = vmatprep.mubr.bf16.mxu0 %v556
        %616 = vmatmul.mubr.bf16.gmra.mrb[0].mxu0 %v555
        %v617 = vpop.f32.mrb[0].mxu0
        %v618 = vadd.f32 %v510, %v617
        %v619 = vpop.f32.mrb[0].mxu0
        %v620 = vpop.f32.mrb[0].mxu0
        %v621 = vadd.f32 %v515, %v620
        %v622 = vpop.f32.mrb[0].mxu0
        %623 = vmatprep.mubr.bf16.mxu0 %v558
        %624 = vmatmul.mubr.bf16.gmra.mrb[0].mxu0 %v557
        %v625 = vpop.f32.mrb[0].mxu0
        %v626 = vadd.f32 %v520, %v625
        %v627 = vpop.f32.mrb[0].mxu0
        %v628 = vpop.f32.mrb[0].mxu0
        %v629 = vadd.f32 %v525, %v628
        %v630 = vpop.f32.mrb[0].mxu0
        %631 = vdwg.mxu0
        %v632 = vmax.f32 %v602, 0.0
        %v633 = vmax.f32 %v605, 0.0
        %v634 = vmax.f32 %v610, 0.0
        %v635 = vmax.f32 %v613, 0.0
        %636 = vrot.lane.b32.xlu0 %v632, 1
        %v637 = vpop.permute.xlu0 %636
        %638 = vrot.lane.b32.xlu0 %v633, 1
        %v639 = vpop.permute.xlu0 %638
        %640 = vrot.lane.b32.xlu0 %v634, 1
        %v641 = vpop.permute.xlu0 %640
        %642 = vrot.lane.b32.xlu0 %v635, 1
        %v643 = vpop.permute.xlu0 %642
        %v644 = vsel %vm446, %v637, 0.0
        %v645 = vsel %vm446, %v639, 0.0
        %v646 = vsel %vm446, %v641, 0.0
        %v647 = vsel %vm446, %v643, 0.0
        %v648 = vpack.c.bf16 %v645, %v644
        %v649 = vpack.c.bf16 %v647, %v646
        %v650 = vpack.c.bf16 %v633, %v632
        %v651 = vpack.c.bf16 %v635, %v634
        %v652 = vld [vmem:[%s2] sm:$0xf]
        %v653 = vld [vmem:[%s2 + $0x4] sm:$0xf]
        %v654 = vld [vmem:[%s2 + $0x8] sm:$0xf]
        %v655 = vld [vmem:[%s2 + $0xc] sm:$0xf]
        %657 = vset.pattern.permute.xlu0 0
        %658 = vperm.xlu0 %657, %v375
        %v659 = vpop.permute.xlu0 %658
        %662 = vset.pattern.permute.xlu0 0
        %663 = vperm.xlu0 %662, %v376
        %v664 = vpop.permute.xlu0 %663
        %667 = vset.pattern.permute.xlu0 0
        %668 = vperm.xlu0 %667, %v377
        %v669 = vpop.permute.xlu0 %668
        %672 = vset.pattern.permute.xlu0 0
        %673 = vperm.xlu0 %672, %v378
        %v674 = vpop.permute.xlu0 %673
        %v680 = vunpack.c.l.b16 %v652
        %v681 = vunpack.c.l.b16 %v653
        %v682 = vunpack.c.l.b16 %v654
        %v683 = vunpack.c.l.b16 %v655
        %v684 = vpack.c.b16 %v681, %v680
        %v685 = vpack.c.b16 %v683, %v682
        %vm686 = vcmask 523264
        %v688 = vsel %vm686, %v684, 0
        %v691 = vsel %vm686, %v685, 0
        %693 = vmatprep.subr.bf16.mxu0 0
        %694 = vmatpush1.bf16.msra.mxu0 %v648
        %695 = vmatprep.subr.bf16.mxu0 0
        %696 = vmatpush1.bf16.msra.mxu0 %v649
        %697 = vmatprep.subr.bf16.mxu0 0
        %698 = vmatpush1.bf16.msra.mxu0 %v650
        %699 = vmatprep.subr.bf16.mxu0 0
        %700 = vmatpush1.bf16.msra.mxu0 %v651
        %701 = vmatprep.subr.bf16.mxu0 0
        %702 = vmatpush1.bf16.msra.mxu0 0
        %703 = vmatprep.subr.bf16.mxu0 0
        %704 = vmatpush1.bf16.msra.mxu0 0
        %705 = vmatprep.subr.bf16.mxu0 0
        %706 = vmatpush1.bf16.msra.mxu0 0
        %707 = vmatprep.subr.bf16.mxu0 0
        %708 = vmatpush1.bf16.msra.mxu0 0
        %709 = vmatprep.subr.bf16.mxu0 0
        %710 = vmatpush1.bf16.msra.mxu0 0
        %711 = vmatprep.subr.bf16.mxu0 0
        %712 = vmatpush1.bf16.msra.mxu0 0
        %713 = vmatprep.subr.bf16.mxu0 0
        %714 = vmatpush1.bf16.msra.mxu0 0
        %715 = vmatprep.subr.bf16.mxu0 0
        %716 = vmatpush1.bf16.msra.mxu0 0
        %717 = vmatprep.subr.bf16.mxu0 0
        %718 = vmatpush1.bf16.msra.mxu0 0
        %719 = vmatprep.subr.bf16.mxu0 0
        %720 = vmatpush1.bf16.msra.mxu0 0
        %721 = vmatprep.subr.bf16.mxu0 0
        %722 = vmatpush1.bf16.msra.mxu0 0
        %723 = vmatprep.subr.bf16.mxu0 0
        %724 = vmatpush1.bf16.msra.mxu0 0
        %725 = vmatprep.mubr.bf16.mxu0 0
        %726 = vmatmul.mubr.bf16.gmra.mrb[0].mxu0 %v688
        %v727 = vpop.f32.mrb[0].mxu0
        %v728 = vadd.f32 %v659, %v727
        %v729 = vpop.f32.mrb[0].mxu0
        %v730 = vpop.f32.mrb[0].mxu0
        %v731 = vadd.f32 %v664, %v730
        %v732 = vpop.f32.mrb[0].mxu0
        %733 = vmatprep.mubr.bf16.mxu0 0
        %734 = vmatmul.mubr.bf16.gmra.mrb[0].mxu0 %v691
        %v735 = vpop.f32.mrb[0].mxu0
        %v736 = vadd.f32 %v669, %v735
        %v737 = vpop.f32.mrb[0].mxu0
        %v738 = vpop.f32.mrb[0].mxu0
        %v739 = vadd.f32 %v674, %v738
        %v740 = vpop.f32.mrb[0].mxu0
        %741 = vdwg.mxu0
        %v742 = vmax.f32 %v728, 0.0
        %v743 = vmax.f32 %v731, 0.0
        %v744 = vmax.f32 %v736, 0.0
        %v745 = vmax.f32 %v739, 0.0
        %v746 = vadd.f32 %v742, %v618
        %v747 = vadd.f32 %v743, %v621
        %v748 = vadd.f32 %v744, %v626
        %v749 = vadd.f32 %v745, %v629
        %v750 = vmax.f32 %v746, 0.0
        %v751 = vmax.f32 %v747, 0.0
        %v752 = vmax.f32 %v748, 0.0
        %v753 = vmax.f32 %v749, 0.0
        %754 = vrot.lane.b32.xlu0 %v750, 2
        %v755 = vpop.permute.xlu0 %754
        %756 = vrot.lane.b32.xlu0 %v751, 2
        %v757 = vpop.permute.xlu0 %756
        %758 = vrot.lane.b32.xlu0 %v752, 2
        %v759 = vpop.permute.xlu0 %758
        %760 = vrot.lane.b32.xlu0 %v753, 2
        %v761 = vpop.permute.xlu0 %760
        %v762 = vsel %vm411, 1, 0
        %vm763 = vcmp.eq.s32.totalorder %v762, 1
        %v764 = vsel %vm763, %v755, 0.0
        %v765 = vsel %vm763, %v757, 0.0
        %v766 = vsel %vm763, %v759, 0.0
        %v767 = vsel %vm763, %v761, 0.0
        %v768 = vpack.c.bf16 %v765, %v764
        %v769 = vpack.c.bf16 %v767, %v766
        %v770 = vpack.c.bf16 %v751, %v750
        %v771 = vpack.c.bf16 %v753, %v752
        %v772 = vld [vmem:[%s3] sm:$0xf]
        %v773 = vld [vmem:[%s3 + $0x4] sm:$0xf]
        %v774 = vld [vmem:[%s3 + $0x8] sm:$0xf]
        %v775 = vld [vmem:[%s3 + $0xc] sm:$0xf]
        %777 = vset.pattern.permute.xlu0 0
        %778 = vperm.xlu0 %777, %v379
        %v779 = vpop.permute.xlu0 %778
        %782 = vset.pattern.permute.xlu0 0
        %783 = vperm.xlu0 %782, %v380
        %v784 = vpop.permute.xlu0 %783
        %787 = vset.pattern.permute.xlu0 0
        %788 = vperm.xlu0 %787, %v381
        %v789 = vpop.permute.xlu0 %788
        %792 = vset.pattern.permute.xlu0 0
        %793 = vperm.xlu0 %792, %v382
        %v794 = vpop.permute.xlu0 %793
        %v800 = vunpack.c.l.b16 %v772
        %v801 = vunpack.c.l.b16 %v773
        %v802 = vunpack.c.l.b16 %v774
        %v803 = vunpack.c.l.b16 %v775
        %v804 = vpack.c.b16 %v801, %v800
        %v805 = vpack.c.b16 %v803, %v802
        %v807 = vsel %vm686, %v804, 0
        %v810 = vsel %vm686, %v805, 0
        %812 = vmatprep.subr.bf16.mxu0 0
        %813 = vmatpush1.bf16.msra.mxu0 %v768
        %814 = vmatprep.subr.bf16.mxu0 0
        %815 = vmatpush1.bf16.msra.mxu0 %v769
        %816 = vmatprep.subr.bf16.mxu0 0
        %817 = vmatpush1.bf16.msra.mxu0 %v770
        %818 = vmatprep.subr.bf16.mxu0 0
        %819 = vmatpush1.bf16.msra.mxu0 %v771
        %820 = vmatprep.subr.bf16.mxu0 0
        %821 = vmatpush1.bf16.msra.mxu0 0
        %822 = vmatprep.subr.bf16.mxu0 0
        %823 = vmatpush1.bf16.msra.mxu0 0
        %824 = vmatprep.subr.bf16.mxu0 0
        %825 = vmatpush1.bf16.msra.mxu0 0
        %826 = vmatprep.subr.bf16.mxu0 0
        %827 = vmatpush1.bf16.msra.mxu0 0
        %828 = vmatprep.subr.bf16.mxu0 0
        %829 = vmatpush1.bf16.msra.mxu0 0
        %830 = vmatprep.subr.bf16.mxu0 0
        %831 = vmatpush1.bf16.msra.mxu0 0
        %832 = vmatprep.subr.bf16.mxu0 0
        %833 = vmatpush1.bf16.msra.mxu0 0
        %834 = vmatprep.subr.bf16.mxu0 0
        %835 = vmatpush1.bf16.msra.mxu0 0
        %836 = vmatprep.subr.bf16.mxu0 0
        %837 = vmatpush1.bf16.msra.mxu0 0
        %838 = vmatprep.subr.bf16.mxu0 0
        %839 = vmatpush1.bf16.msra.mxu0 0
        %840 = vmatprep.subr.bf16.mxu0 0
        %841 = vmatpush1.bf16.msra.mxu0 0
        %842 = vmatprep.subr.bf16.mxu0 0
        %843 = vmatpush1.bf16.msra.mxu0 0
        %844 = vmatprep.mubr.bf16.mxu0 0
        %845 = vmatmul.mubr.bf16.gmra.mrb[0].mxu0 %v807
        %v846 = vpop.f32.mrb[0].mxu0
        %v847 = vadd.f32 %v779, %v846
        %v848 = vpop.f32.mrb[0].mxu0
        %v849 = vpop.f32.mrb[0].mxu0
        %v850 = vadd.f32 %v784, %v849
        %v851 = vpop.f32.mrb[0].mxu0
        %852 = vmatprep.mubr.bf16.mxu0 0
        %853 = vmatmul.mubr.bf16.gmra.mrb[0].mxu0 %v810
        %v854 = vpop.f32.mrb[0].mxu0
        %v855 = vadd.f32 %v789, %v854
        %v856 = vpop.f32.mrb[0].mxu0
        %v857 = vpop.f32.mrb[0].mxu0
        %v858 = vadd.f32 %v794, %v857
        %v859 = vpop.f32.mrb[0].mxu0
        %860 = vdwg.mxu0
        %v861 = vmax.f32 %v847, 0.0
        %v862 = vmax.f32 %v850, 0.0
        %v863 = vmax.f32 %v855, 0.0
        %v864 = vmax.f32 %v858, 0.0
        %865 = vrot.lane.b32.xlu0 %v861, 2
        %v866 = vpop.permute.xlu0 %865
        %867 = vrot.lane.b32.xlu0 %v862, 2
        %v868 = vpop.permute.xlu0 %867
        %869 = vrot.lane.b32.xlu0 %v863, 2
        %v870 = vpop.permute.xlu0 %869
        %871 = vrot.lane.b32.xlu0 %v864, 2
        %v872 = vpop.permute.xlu0 %871
        %v873 = vsel %vm763, %v866, 0.0
        %v874 = vsel %vm763, %v868, 0.0
        %v875 = vsel %vm763, %v870, 0.0
        %v876 = vsel %vm763, %v872, 0.0
        %v877 = vpack.c.bf16 %v874, %v873
        %v878 = vpack.c.bf16 %v876, %v875
        %v879 = vpack.c.bf16 %v862, %v861
        %v880 = vpack.c.bf16 %v864, %v863
        %v881 = vld [vmem:[%s4] sm:$0xf]
        %v882 = vld [vmem:[%s4 + $0x4] sm:$0xf]
        %v883 = vld [vmem:[%s4 + $0x8] sm:$0xf]
        %v884 = vld [vmem:[%s4 + $0xc] sm:$0xf]
        %886 = vset.pattern.permute.xlu0 0
        %887 = vperm.xlu0 %886, %v383
        %v888 = vpop.permute.xlu0 %887
        %891 = vset.pattern.permute.xlu0 0
        %892 = vperm.xlu0 %891, %v384
        %v893 = vpop.permute.xlu0 %892
        %896 = vset.pattern.permute.xlu0 0
        %897 = vperm.xlu0 %896, %v385
        %v898 = vpop.permute.xlu0 %897
        %901 = vset.pattern.permute.xlu0 0
        %902 = vperm.xlu0 %901, %v386
        %v903 = vpop.permute.xlu0 %902
        %v909 = vunpack.c.l.b16 %v881
        %v910 = vunpack.c.l.b16 %v882
        %v911 = vunpack.c.l.b16 %v883
        %v912 = vunpack.c.l.b16 %v884
        %v913 = vpack.c.b16 %v910, %v909
        %v914 = vpack.c.b16 %v912, %v911
        %v916 = vsel %vm686, %v913, 0
        %v919 = vsel %vm686, %v914, 0
        %921 = vmatprep.subr.bf16.mxu0 0
        %922 = vmatpush1.bf16.msra.mxu0 %v877
        %923 = vmatprep.subr.bf16.mxu0 0
        %924 = vmatpush1.bf16.msra.mxu0 %v878
        %925 = vmatprep.subr.bf16.mxu0 0
        %926 = vmatpush1.bf16.msra.mxu0 %v879
        %927 = vmatprep.subr.bf16.mxu0 0
        %928 = vmatpush1.bf16.msra.mxu0 %v880
        %929 = vmatprep.subr.bf16.mxu0 0
        %930 = vmatpush1.bf16.msra.mxu0 0
        %931 = vmatprep.subr.bf16.mxu0 0
        %932 = vmatpush1.bf16.msra.mxu0 0
        %933 = vmatprep.subr.bf16.mxu0 0
        %934 = vmatpush1.bf16.msra.mxu0 0
        %935 = vmatprep.subr.bf16.mxu0 0
        %936 = vmatpush1.bf16.msra.mxu0 0
        %937 = vmatprep.subr.bf16.mxu0 0
        %938 = vmatpush1.bf16.msra.mxu0 0
        %939 = vmatprep.subr.bf16.mxu0 0
        %940 = vmatpush1.bf16.msra.mxu0 0
        %941 = vmatprep.subr.bf16.mxu0 0
        %942 = vmatpush1.bf16.msra.mxu0 0
        %943 = vmatprep.subr.bf16.mxu0 0
        %944 = vmatpush1.bf16.msra.mxu0 0
        %945 = vmatprep.subr.bf16.mxu0 0
        %946 = vmatpush1.bf16.msra.mxu0 0
        %947 = vmatprep.subr.bf16.mxu0 0
        %948 = vmatpush1.bf16.msra.mxu0 0
        %949 = vmatprep.subr.bf16.mxu0 0
        %950 = vmatpush1.bf16.msra.mxu0 0
        %951 = vmatprep.subr.bf16.mxu0 0
        %952 = vmatpush1.bf16.msra.mxu0 0
        %953 = vmatprep.mubr.bf16.mxu0 0
        %954 = vmatmul.mubr.bf16.gmra.mrb[0].mxu0 %v916
        %v955 = vpop.f32.mrb[0].mxu0
        %v956 = vadd.f32 %v888, %v955
        %v957 = vpop.f32.mrb[0].mxu0
        %v958 = vpop.f32.mrb[0].mxu0
        %v959 = vadd.f32 %v893, %v958
        %v960 = vpop.f32.mrb[0].mxu0
        %961 = vmatprep.mubr.bf16.mxu0 0
        %962 = vmatmul.mubr.bf16.gmra.mrb[0].mxu0 %v919
        %v963 = vpop.f32.mrb[0].mxu0
        %v964 = vadd.f32 %v898, %v963
        %v965 = vpop.f32.mrb[0].mxu0
        %v966 = vpop.f32.mrb[0].mxu0
        %v967 = vadd.f32 %v903, %v966
        %v968 = vpop.f32.mrb[0].mxu0
        %969 = vdwg.mxu0
        %v970 = vmax.f32 %v956, 0.0
        %v971 = vmax.f32 %v959, 0.0
        %v972 = vmax.f32 %v964, 0.0
        %v973 = vmax.f32 %v967, 0.0
        %v974 = vadd.f32 %v970, %v750
        %v975 = vadd.f32 %v971, %v751
        %v976 = vadd.f32 %v972, %v752
        %v977 = vadd.f32 %v973, %v753
        %v978 = vmax.f32 %v974, 0.0
        %v979 = vmax.f32 %v975, 0.0
        %v980 = vmax.f32 %v976, 0.0
        %v981 = vmax.f32 %v977, 0.0
        %982 = vrot.lane.b32.xlu0 %v978, 4
        %v983 = vpop.permute.xlu0 %982
        %984 = vrot.lane.b32.xlu0 %v979, 4
        %v985 = vpop.permute.xlu0 %984
        %986 = vrot.lane.b32.xlu0 %v980, 4
        %v987 = vpop.permute.xlu0 %986
        %988 = vrot.lane.b32.xlu0 %v981, 4
        %v989 = vpop.permute.xlu0 %988
        %v990 = vsel %vm412, 1, 0
        %vm991 = vcmp.eq.s32.totalorder %v990, 1
        %v992 = vsel %vm991, %v983, 0.0
        %v993 = vsel %vm991, %v985, 0.0
        %v994 = vsel %vm991, %v987, 0.0
        %v995 = vsel %vm991, %v989, 0.0
        %v996 = vpack.c.bf16 %v993, %v992
        %v997 = vpack.c.bf16 %v995, %v994
        %v998 = vpack.c.bf16 %v979, %v978
        %v999 = vpack.c.bf16 %v981, %v980
        %v1000 = vld [vmem:[%s5] sm:$0xf]
        %v1001 = vld [vmem:[%s5 + $0x4] sm:$0xf]
        %v1002 = vld [vmem:[%s5 + $0x8] sm:$0xf]
        %v1003 = vld [vmem:[%s5 + $0xc] sm:$0xf]
        %1005 = vset.pattern.permute.xlu0 0
        %1006 = vperm.xlu0 %1005, %v387
        %v1007 = vpop.permute.xlu0 %1006
        %1010 = vset.pattern.permute.xlu0 0
        %1011 = vperm.xlu0 %1010, %v388
        %v1012 = vpop.permute.xlu0 %1011
        %1015 = vset.pattern.permute.xlu0 0
        %1016 = vperm.xlu0 %1015, %v389
        %v1017 = vpop.permute.xlu0 %1016
        %1020 = vset.pattern.permute.xlu0 0
        %1021 = vperm.xlu0 %1020, %v390
        %v1022 = vpop.permute.xlu0 %1021
        %v1028 = vunpack.c.l.b16 %v1000
        %v1029 = vunpack.c.l.b16 %v1001
        %v1030 = vunpack.c.l.b16 %v1002
        %v1031 = vunpack.c.l.b16 %v1003
        %v1032 = vpack.c.b16 %v1029, %v1028
        %v1033 = vpack.c.b16 %v1031, %v1030
        %v1035 = vsel %vm686, %v1032, 0
        %v1038 = vsel %vm686, %v1033, 0
        %1040 = vmatprep.subr.bf16.mxu0 0
        %1041 = vmatpush1.bf16.msra.mxu0 %v996
        %1042 = vmatprep.subr.bf16.mxu0 0
        %1043 = vmatpush1.bf16.msra.mxu0 %v997
        %1044 = vmatprep.subr.bf16.mxu0 0
        %1045 = vmatpush1.bf16.msra.mxu0 %v998
        %1046 = vmatprep.subr.bf16.mxu0 0
        %1047 = vmatpush1.bf16.msra.mxu0 %v999
        %1048 = vmatprep.subr.bf16.mxu0 0
        %1049 = vmatpush1.bf16.msra.mxu0 0
        %1050 = vmatprep.subr.bf16.mxu0 0
        %1051 = vmatpush1.bf16.msra.mxu0 0
        %1052 = vmatprep.subr.bf16.mxu0 0
        %1053 = vmatpush1.bf16.msra.mxu0 0
        %1054 = vmatprep.subr.bf16.mxu0 0
        %1055 = vmatpush1.bf16.msra.mxu0 0
        %1056 = vmatprep.subr.bf16.mxu0 0
        %1057 = vmatpush1.bf16.msra.mxu0 0
        %1058 = vmatprep.subr.bf16.mxu0 0
        %1059 = vmatpush1.bf16.msra.mxu0 0
        %1060 = vmatprep.subr.bf16.mxu0 0
        %1061 = vmatpush1.bf16.msra.mxu0 0
        %1062 = vmatprep.subr.bf16.mxu0 0
        %1063 = vmatpush1.bf16.msra.mxu0 0
        %1064 = vmatprep.subr.bf16.mxu0 0
        %1065 = vmatpush1.bf16.msra.mxu0 0
        %1066 = vmatprep.subr.bf16.mxu0 0
        %1067 = vmatpush1.bf16.msra.mxu0 0
        %1068 = vmatprep.subr.bf16.mxu0 0
        %1069 = vmatpush1.bf16.msra.mxu0 0
        %1070 = vmatprep.subr.bf16.mxu0 0
        %1071 = vmatpush1.bf16.msra.mxu0 0
        %1072 = vmatprep.mubr.bf16.mxu0 0
        %1073 = vmatmul.mubr.bf16.gmra.mrb[0].mxu0 %v1035
        %v1074 = vpop.f32.mrb[0].mxu0
        %v1075 = vadd.f32 %v1007, %v1074
        %v1076 = vpop.f32.mrb[0].mxu0
        %v1077 = vpop.f32.mrb[0].mxu0
        %v1078 = vadd.f32 %v1012, %v1077
        %v1079 = vpop.f32.mrb[0].mxu0
        %1080 = vmatprep.mubr.bf16.mxu0 0
        %1081 = vmatmul.mubr.bf16.gmra.mrb[0].mxu0 %v1038
        %v1082 = vpop.f32.mrb[0].mxu0
        %v1083 = vadd.f32 %v1017, %v1082
        %v1084 = vpop.f32.mrb[0].mxu0
        %v1085 = vpop.f32.mrb[0].mxu0
        %v1086 = vadd.f32 %v1022, %v1085
        %v1087 = vpop.f32.mrb[0].mxu0
        %1088 = vdwg.mxu0
        %v1089 = vmax.f32 %v1075, 0.0
        %v1090 = vmax.f32 %v1078, 0.0
        %v1091 = vmax.f32 %v1083, 0.0
        %v1092 = vmax.f32 %v1086, 0.0
        %1093 = vrot.lane.b32.xlu0 %v1089, 4
        %v1094 = vpop.permute.xlu0 %1093
        %1095 = vrot.lane.b32.xlu0 %v1090, 4
        %v1096 = vpop.permute.xlu0 %1095
        %1097 = vrot.lane.b32.xlu0 %v1091, 4
        %v1098 = vpop.permute.xlu0 %1097
        %1099 = vrot.lane.b32.xlu0 %v1092, 4
        %v1100 = vpop.permute.xlu0 %1099
        %v1101 = vsel %vm991, %v1094, 0.0
        %v1102 = vsel %vm991, %v1096, 0.0
        %v1103 = vsel %vm991, %v1098, 0.0
        %v1104 = vsel %vm991, %v1100, 0.0
        %v1105 = vpack.c.bf16 %v1102, %v1101
        %v1106 = vpack.c.bf16 %v1104, %v1103
        %v1107 = vpack.c.bf16 %v1090, %v1089
        %v1108 = vpack.c.bf16 %v1092, %v1091
        %v1109 = vld [vmem:[%s6] sm:$0xf]
        %v1110 = vld [vmem:[%s6 + $0x4] sm:$0xf]
        %v1111 = vld [vmem:[%s6 + $0x8] sm:$0xf]
        %v1112 = vld [vmem:[%s6 + $0xc] sm:$0xf]
        %1114 = vset.pattern.permute.xlu0 0
        %1115 = vperm.xlu0 %1114, %v391
        %v1116 = vpop.permute.xlu0 %1115
        %1119 = vset.pattern.permute.xlu0 0
        %1120 = vperm.xlu0 %1119, %v392
        %v1121 = vpop.permute.xlu0 %1120
        %1124 = vset.pattern.permute.xlu0 0
        %1125 = vperm.xlu0 %1124, %v393
        %v1126 = vpop.permute.xlu0 %1125
        %1129 = vset.pattern.permute.xlu0 0
        %1130 = vperm.xlu0 %1129, %v394
        %v1131 = vpop.permute.xlu0 %1130
        %v1137 = vunpack.c.l.b16 %v1109
        %v1138 = vunpack.c.l.b16 %v1110
        %v1139 = vunpack.c.l.b16 %v1111
        %v1140 = vunpack.c.l.b16 %v1112
        %v1141 = vpack.c.b16 %v1138, %v1137
        %v1142 = vpack.c.b16 %v1140, %v1139
        %v1144 = vsel %vm686, %v1141, 0
        %v1147 = vsel %vm686, %v1142, 0
        %1149 = vmatprep.subr.bf16.mxu0 0
        %1150 = vmatpush1.bf16.msra.mxu0 %v1105
        %1151 = vmatprep.subr.bf16.mxu0 0
        %1152 = vmatpush1.bf16.msra.mxu0 %v1106
        %1153 = vmatprep.subr.bf16.mxu0 0
        %1154 = vmatpush1.bf16.msra.mxu0 %v1107
        %1155 = vmatprep.subr.bf16.mxu0 0
        %1156 = vmatpush1.bf16.msra.mxu0 %v1108
        %1157 = vmatprep.subr.bf16.mxu0 0
        %1158 = vmatpush1.bf16.msra.mxu0 0
        %1159 = vmatprep.subr.bf16.mxu0 0
        %1160 = vmatpush1.bf16.msra.mxu0 0
        %1161 = vmatprep.subr.bf16.mxu0 0
        %1162 = vmatpush1.bf16.msra.mxu0 0
        %1163 = vmatprep.subr.bf16.mxu0 0
        %1164 = vmatpush1.bf16.msra.mxu0 0
        %1165 = vmatprep.subr.bf16.mxu0 0
        %1166 = vmatpush1.bf16.msra.mxu0 0
        %1167 = vmatprep.subr.bf16.mxu0 0
        %1168 = vmatpush1.bf16.msra.mxu0 0
        %1169 = vmatprep.subr.bf16.mxu0 0
        %1170 = vmatpush1.bf16.msra.mxu0 0
        %1171 = vmatprep.subr.bf16.mxu0 0
        %1172 = vmatpush1.bf16.msra.mxu0 0
        %1173 = vmatprep.subr.bf16.mxu0 0
        %1174 = vmatpush1.bf16.msra.mxu0 0
        %1175 = vmatprep.subr.bf16.mxu0 0
        %1176 = vmatpush1.bf16.msra.mxu0 0
        %1177 = vmatprep.subr.bf16.mxu0 0
        %1178 = vmatpush1.bf16.msra.mxu0 0
        %1179 = vmatprep.subr.bf16.mxu0 0
        %1180 = vmatpush1.bf16.msra.mxu0 0
        %1181 = vmatprep.mubr.bf16.mxu0 0
        %1182 = vmatmul.mubr.bf16.gmra.mrb[0].mxu0 %v1144
        %v1183 = vpop.f32.mrb[0].mxu0
        %v1184 = vadd.f32 %v1116, %v1183
        %v1185 = vpop.f32.mrb[0].mxu0
        %v1186 = vpop.f32.mrb[0].mxu0
        %v1187 = vadd.f32 %v1121, %v1186
        %v1188 = vpop.f32.mrb[0].mxu0
        %1189 = vmatprep.mubr.bf16.mxu0 0
        %1190 = vmatmul.mubr.bf16.gmra.mrb[0].mxu0 %v1147
        %v1191 = vpop.f32.mrb[0].mxu0
        %v1192 = vadd.f32 %v1126, %v1191
        %v1193 = vpop.f32.mrb[0].mxu0
        %v1194 = vpop.f32.mrb[0].mxu0
        %v1195 = vadd.f32 %v1131, %v1194
        %v1196 = vpop.f32.mrb[0].mxu0
        %1197 = vdwg.mxu0
        %v1198 = vmax.f32 %v1184, 0.0
        %v1199 = vmax.f32 %v1187, 0.0
        %v1200 = vmax.f32 %v1192, 0.0
        %v1201 = vmax.f32 %v1195, 0.0
        %v1202 = vadd.f32 %v1198, %v978
        %v1203 = vadd.f32 %v1199, %v979
        %v1204 = vadd.f32 %v1200, %v980
        %v1205 = vadd.f32 %v1201, %v981
        %v1206 = vmax.f32 %v1202, 0.0
        %v1207 = vmax.f32 %v1203, 0.0
        %v1208 = vmax.f32 %v1204, 0.0
        %v1209 = vmax.f32 %v1205, 0.0
        %v1210 = vld [vmem:[%s7] sm:$0xf]
        %v1211 = vpack.c.bf16 %v1207, %v1206
        %v1212 = vpack.c.bf16 %v1209, %v1208
        %1214 = vset.pattern.permute.xlu0 0
        %1215 = vperm.xlu0 %1214, %v395
        %v1216 = vpop.permute.xlu0 %1215
        %vm1218 = vcmask 261120
        %v1220 = vsel %vm1218, %v1210, 0
        %1222 = vmatprep.subr.bf16.mxu0 0
        %1223 = vmatpush1.bf16.msra.mxu0 %v1211
        %1224 = vmatprep.subr.bf16.mxu0 0
        %1225 = vmatpush1.bf16.msra.mxu0 %v1212
        %1226 = vmatprep.subr.bf16.mxu0 0
        %1227 = vmatpush1.bf16.msra.mxu0 0
        %1228 = vmatprep.subr.bf16.mxu0 0
        %1229 = vmatpush1.bf16.msra.mxu0 0
        %1230 = vmatprep.subr.bf16.mxu0 0
        %1231 = vmatpush1.bf16.msra.mxu0 0
        %1232 = vmatprep.subr.bf16.mxu0 0
        %1233 = vmatpush1.bf16.msra.mxu0 0
        %1234 = vmatprep.subr.bf16.mxu0 0
        %1235 = vmatpush1.bf16.msra.mxu0 0
        %1236 = vmatprep.subr.bf16.mxu0 0
        %1237 = vmatpush1.bf16.msra.mxu0 0
        %1238 = vmatprep.subr.bf16.mxu0 0
        %1239 = vmatpush1.bf16.msra.mxu0 0
        %1240 = vmatprep.subr.bf16.mxu0 0
        %1241 = vmatpush1.bf16.msra.mxu0 0
        %1242 = vmatprep.subr.bf16.mxu0 0
        %1243 = vmatpush1.bf16.msra.mxu0 0
        %1244 = vmatprep.subr.bf16.mxu0 0
        %1245 = vmatpush1.bf16.msra.mxu0 0
        %1246 = vmatprep.subr.bf16.mxu0 0
        %1247 = vmatpush1.bf16.msra.mxu0 0
        %1248 = vmatprep.subr.bf16.mxu0 0
        %1249 = vmatpush1.bf16.msra.mxu0 0
        %1250 = vmatprep.subr.bf16.mxu0 0
        %1251 = vmatpush1.bf16.msra.mxu0 0
        %1252 = vmatprep.subr.bf16.mxu0 0
        %1253 = vmatpush1.bf16.msra.mxu0 0
        %1254 = vmatprep.mubr.bf16.mxu0 0
        %1255 = vmatmul.mubr.bf16.gmra.mrb[0].mxu0 %v1220
        %v1256 = vpop.f32.mrb[0].mxu0
        %v1257 = vadd.f32 %v1216, %v1256
        %v1258 = vpop.f32.mrb[0].mxu0
        %v1259 = vpop.f32.mrb[0].mxu0
        %v1260 = vpop.f32.mrb[0].mxu0
        %1261 = vdwg.mxu0
        %1262 = vst [vmem:[%s349] sm:$0xff] %v1257
        %s1263 = sand.u32 %s228, 1
        %s1264 = scalar_lea.sflag [#allocation4], %s1263
        %s1265 = sand.u32 %s228, 1
        %s1266 = smul.addr %s1265, 8
        %s1267 = scalar_lea.vmem [#allocation5], %s1266
        // Predicated region
        $region61: #{tpu_custom_call.1} parent=55 // pred_check
          %p1268 = pneg %p238
        $region62: #{tpu_custom_call.1} parent=55 // pred_check_branch
          %1270 = sbr.rel (%p1268) target = $region64
        $region63: #{tpu_custom_call.1} parent=55 // pred_region
          %s1272 = ssub.s32 128, 128
          %1273 = vsyncadd %s1264, %s1272
          %s1274 = smul.addr %s26, 128
          %s1275 = scalar_lea.hbm %s9, %s1274
          %s1277 = sshll.u32 %s1267, 4
          %s1278 = int_to_ptr.vmem [resolvable:$true] %s1277
          %1280 = dma.vmem_to_hbm [thread:$0]  %s1278, 128, %s1275, %s1264
        $region64: #{tpu_custom_call.1} parent=55 // pred_fallthru
          _
      $region56: #{tpu_custom_call.1} parent=5 // pred_fallthru
        _
      %p1281 = scmp.le.s32.totalorder 2, %s21
      // Predicated region
      $region65: #{tpu_custom_call.1} parent=5 // pred_check
        %p1282 = pneg %p1281
      $region66: #{tpu_custom_call.1} parent=5 // pred_check_branch
        %1284 = sbr.rel (%p1282) target = $region68
      $region67: #{tpu_custom_call.1} parent=5 // pred_region
        %s1285 = ssub.s32 %s21, 2
        // Predicated region
        $region69: #{tpu_custom_call.1} parent=67 // pred_check
          %p1286 = pneg %p244
        $region70: #{tpu_custom_call.1} parent=67 // pred_check_branch
          %1288 = sbr.rel (%p1286) target = $region72
        $region71: #{tpu_custom_call.1} parent=67 // pred_region
          %s1289 = sand.u32 %s229, 1
          %s1290 = scalar_lea.sflag [#allocation4], %s1289
          %s1291 = sand.u32 %s229, 1
          %s1292 = smul.addr %s1291, 8
          %s1293 = scalar_lea.vmem [#allocation5], %s1292
          %1294 = dma.done %s1290, 128
        $region72: #{tpu_custom_call.1} parent=67 // pred_fallthru
          _
      $region68: #{tpu_custom_call.1} parent=5 // pred_fallthru
        _
    $region6: #{tpu_custom_call.1} parent=1 // loop_footer
      %s25 = sadd.s32 1, %s21
    $region7: #{tpu_custom_call.1} parent=1 // loop_footer_branch
      %20 = sbr.rel target = $region3
    $region8: #{tpu_custom_call.1} parent=1 // loop_exit
      _
    %1295 = vsyncpa [#allocation3], 1
    %s1296 = scalar_lea.sflag [#allocation3], 1
    %1297 = vsyncpa %s1296, 1
    %1298 = vsyncpa [#allocation4], 1
    %s1299 = scalar_lea.sflag [#allocation4], 1
    %1300 = vsyncpa %s1299, 1

</llo_original>
